<compile_context>
chip_gen: v5e
topology: v5e:2x2
jax: 0.10.0
libtpu: 0.0.40
codegen_flags: <defaults>
</compile_context>

<pallas_src>
import jax
import jax.numpy as jnp
from jax import lax
from jax.experimental import pallas as pl
from jax.experimental.pallas import tpu as pltpu


# ----------------------------------------------------------------------------
# Fused Pallas kernel
# ----------------------------------------------------------------------------

def lstm_base_fused_kernel(x_ref, wih_ref, b_in_ref, whh_f_ref, whh_b_ref,
                           w1_ref, b1_ref, w2_ref, b2_ref, out_ref, y_sc):
    """Fused bidirectional LSTM + flatten + fc1 + ReLU + fc2.

    Shapes (all f32, fully VMEM-resident):
      x_ref    : (T*B, D)    time-major flattened input (row index = t*B + b)
      wih_ref  : (D, 8H)     [W_ih_fwd | W_ih_bwd], gate order [i, f, o, g]
      b_in_ref : (1, 8H)     [b_fwd | b_bwd]  (b_ih + b_hh already summed)
      whh_*    : (H, 4H)     hidden->gates per direction, gate order [i, f, o, g]
      w1_ref   : (T*2H, FC)  fc1 weight (stored transposed)
      b1_ref   : (1, FC)
      w2_ref   : (FC, O)     fc2 weight (stored transposed)
      b2_ref   : (1, O)
      out_ref  : (B, O)
      y_sc     : (B, T*2H)   lane-dense LSTM-output scratch (PyTorch flatten order)
    """
    B = out_ref.shape[0]
    H = whh_f_ref.shape[0]
    T = x_ref.shape[0] // B

    # ---- hoisted input projection: one (T*B, D) x (D, 8H) MXU pass ----------
    gates_in = (jnp.dot(x_ref[...], wih_ref[...],
                        preferred_element_type=jnp.float32) + b_in_ref[...])

    # Hoist weight loads out of the unrolled loop.
    whh_f = whh_f_ref[...]
    whh_b = whh_b_ref[...]

    def activate(gates, c):
        # gate order [i, f, o, g]: one sigmoid over 3H lanes, one tanh over H.
        sig = jax.nn.sigmoid(gates[:, :3 * H])
        i = sig[:, 0:H]
        f = sig[:, H:2 * H]
        o = sig[:, 2 * H:3 * H]
        g = jnp.tanh(gates[:, 3 * H:])
        c_new = f * c + i * g
        h_new = o * jnp.tanh(c_new)
        return h_new, c_new

    zeros = jnp.zeros((B, H), jnp.float32)
    h_f = c_f = zeros
    h_b = c_b = zeros

    # Fused, fully-unrolled recurrence: step s advances the forward direction on
    # x[s] and the backward direction on x[T-1-s] (two independent dep chains,
    # interleaved so MXU pushes of one overlap gate math of the other).
    for s in range(T):
        t_b = T - 1 - s
        g_f = gates_in[s * B:(s + 1) * B, 0:4 * H]
        g_b = gates_in[t_b * B:(t_b + 1) * B, 4 * H:8 * H]

        gates_f = g_f + jnp.dot(h_f, whh_f, preferred_element_type=jnp.float32)
        gates_b = g_b + jnp.dot(h_b, whh_b, preferred_element_type=jnp.float32)

        h_f, c_f = activate(gates_f, c_f)
        h_b, c_b = activate(gates_b, c_b)

        # PyTorch bidirectional flatten order over (T, 2H): [h_fwd_t, h_bwd_t].
        y_sc[:, s * 2 * H: s * 2 * H + H] = h_f
        y_sc[:, t_b * 2 * H + H: (t_b + 1) * 2 * H] = h_b

    # ---- head: fc1 -> ReLU -> fc2 on the lane-dense (B, T*2H) block ----------
    y = y_sc[...]
    h1 = jnp.maximum(
        jnp.dot(y, w1_ref[...], preferred_element_type=jnp.float32) + b1_ref[...],
        0.0)
    out_ref[...] = (jnp.dot(h1, w2_ref[...],
                            preferred_element_type=jnp.float32) + b2_ref[...])


# ----------------------------------------------------------------------------
# Wrapper
# ----------------------------------------------------------------------------

_VMEM = pl.BlockSpec(memory_space=pltpu.MemorySpace.VMEM)


def lstm_base_forward(x_btd, kp):
    """Equivalent of LSTMBase.forward. x_btd: (B, T, D) float32 -> (B, O)."""
    B, T, D = x_btd.shape
    H = kp["whh_f"].shape[0]
    O = kp["w2"].shape[1]

    # (B, T, D) -> time-major (T*B, D); done once outside the kernel.
    x_flat = jnp.transpose(x_btd, (1, 0, 2)).reshape(T * B, D)

    return pl.pallas_call(
        lstm_base_fused_kernel,
        out_shape=jax.ShapeDtypeStruct((B, O), jnp.float32),
        in_specs=[_VMEM] * 9,
        out_specs=_VMEM,
        scratch_shapes=[pltpu.VMEM((B, T * 2 * H), jnp.float32)],
    )(x_flat, kp["wih"], kp["b_in"], kp["whh_f"], kp["whh_b"],
      kp["w1"], kp["b1"], kp["w2"], kp["b2"])


# ----------------------------------------------------------------------------
# Parameter construction (PyTorch layouts) + kernel-layout conversion
# ----------------------------------------------------------------------------

def init_torch_params(key, input_size, hidden_size, tokens_length,
                      fc_size=32, output_size=1):
    """Deterministic synthetic params in native PyTorch layouts / gate order."""
    H, D = hidden_size, input_size
    ks = iter(jax.random.split(key, 16))
    s_lstm = 1.0 / jnp.sqrt(H)

    def u(kk, shape, s):
        return jax.random.uniform(kk, shape, jnp.float32, -s, s)

    p = {}
    for tag in ("f", "b"):
        p[f"w_ih_{tag}"] = u(next(ks), (4 * H, D), s_lstm)  # gates i,f,g,o
        p[f"w_hh_{tag}"] = u(next(ks), (4 * H, H), s_lstm)
        p[f"b_ih_{tag}"] = u(next(ks), (4 * H,), s_lstm)
        p[f"b_hh_{tag}"] = u(next(ks), (4 * H,), s_lstm)

    in1 = hidden_size * tokens_length * 2
    s1 = 1.0 / jnp.sqrt(in1)
    s2 = 1.0 / jnp.sqrt(fc_size)
    p["fc1_w"] = u(next(ks), (fc_size, in1), s1)
    p["fc1_b"] = u(next(ks), (fc_size,), s1)
    p["fc2_w"] = u(next(ks), (output_size, fc_size), s2)
    p["fc2_b"] = u(next(ks), (output_size,), s2)
    return p


def _reorder_ifog(w):
    """PyTorch gate order (i, f, g, o) -> kernel order (i, f, o, g) along axis 0."""
    i, f, g, o = jnp.split(w, 4, axis=0)
    return jnp.concatenate([i, f, o, g], axis=0)


def prepare_kernel_params(tp):
    kp, wih, b_in = {}, {}, {}
    for tag in ("f", "b"):
        wih[tag] = _reorder_ifog(tp[f"w_ih_{tag}"]).T                  # (D, 4H)
        kp[f"whh_{tag}"] = _reorder_ifog(tp[f"w_hh_{tag}"]).T          # (H, 4H)
        b_sum = (tp[f"b_ih_{tag}"] + tp[f"b_hh_{tag}"])[:, None]       # (4H, 1)
        b_in[tag] = _reorder_ifog(b_sum).T                             # (1, 4H)
    kp["wih"] = jnp.concatenate([wih["f"], wih["b"]], axis=1)          # (D, 8H)
    kp["b_in"] = jnp.concatenate([b_in["f"], b_in["b"]], axis=1)       # (1, 8H)
    kp["w1"] = tp["fc1_w"].T                                           # (T*2H, FC)
    kp["b1"] = tp["fc1_b"][None, :]
    kp["w2"] = tp["fc2_w"].T                                           # (FC, O)
    kp["b2"] = tp["fc2_b"][None, :]
    return kp


# ----------------------------------------------------------------------------
# Pure-JAX reference (straight from PyTorch-layout params, gate order i,f,g,o)
# ----------------------------------------------------------------------------

def lstm_base_ref(x_btd, tp):
    B, T, D = x_btd.shape
    H = tp["w_hh_f"].shape[1]
    x_tbd = jnp.transpose(x_btd, (1, 0, 2))

    def run_dir(x_seq, w_ih, w_hh, b_ih, b_hh):
        wih, whh = w_ih.T, w_hh.T
        b = (b_ih + b_hh)[None, :]

        def cell(carry, xt):
            h, c = carry
            gates = xt @ wih + h @ whh + b
            i = jax.nn.sigmoid(gates[:, 0:H])
            f = jax.nn.sigmoid(gates[:, H:2 * H])
            g = jnp.tanh(gates[:, 2 * H:3 * H])
            o = jax.nn.sigmoid(gates[:, 3 * H:4 * H])
            c = f * c + i * g
            h = o * jnp.tanh(c)
            return (h, c), h

        h0 = (jnp.zeros((B, H), jnp.float32), jnp.zeros((B, H), jnp.float32))
        _, ys = lax.scan(cell, h0, x_seq)
        return ys

    yf = run_dir(x_tbd, tp["w_ih_f"], tp["w_hh_f"], tp["b_ih_f"], tp["b_hh_f"])
    yb = run_dir(x_tbd[::-1], tp["w_ih_b"], tp["w_hh_b"],
                 tp["b_ih_b"], tp["b_hh_b"])[::-1]
    y = jnp.concatenate([yf, yb], axis=-1)              # (T, B, 2H)
    y = jnp.transpose(y, (1, 0, 2)).reshape(B, -1)      # (B, T*2H)
    h1 = jnp.maximum(y @ tp["fc1_w"].T + tp["fc1_b"], 0.0)
    return h1 @ tp["fc2_w"].T + tp["fc2_b"]


# ----------------------------------------------------------------------------
# main
# ----------------------------------------------------------------------------

if __name__ == "__main__":
    B, T, D, H = 2, 8, 16, 32   # batch, tokens_length, input_size, hidden_size

    key = jax.random.PRNGKey(0)
    k_x, k_p = jax.random.split(key)
    x = jax.random.normal(k_x, (B, T, D), jnp.float32)

    tp = init_torch_params(k_p, input_size=D, hidden_size=H, tokens_length=T)
    kp = prepare_kernel_params(tp)

    fwd = jax.jit(lstm_base_forward)
    out = jax.block_until_ready(fwd(x, kp))
    ref = jax.block_until_ready(lstm_base_ref(x, tp))

    assert out.shape == (B, 1), out.shape
    assert jnp.allclose(out, ref, atol=1e-3, rtol=1e-3), (out, ref)

    print("KERNEL_OK")
</pallas_src>

<mosaic_0001>
module attributes {stable_mosaic.version = 11 : i64} {
  func.func @lstm_base_fused_kernel(%arg0: memref<16x16xf32, #tpu.memory_space<vmem>>, %arg1: memref<16x256xf32, #tpu.memory_space<vmem>>, %arg2: memref<1x256xf32, #tpu.memory_space<vmem>>, %arg3: memref<32x128xf32, #tpu.memory_space<vmem>>, %arg4: memref<32x128xf32, #tpu.memory_space<vmem>>, %arg5: memref<512x32xf32, #tpu.memory_space<vmem>>, %arg6: memref<1x32xf32, #tpu.memory_space<vmem>>, %arg7: memref<32x1xf32, #tpu.memory_space<vmem>>, %arg8: memref<1x1xf32, #tpu.memory_space<vmem>>, %arg9: memref<2x1xf32, #tpu.memory_space<vmem>>, %arg10: memref<2x512xf32, #tpu.memory_space<vmem>>) attributes {dimension_semantics = [], scalar_prefetch = 0 : i64, scratch_operands = 1 : i64, tpu.core_type = #tpu.core_type<tc>} {
    %c0 = arith.constant 0 : index
    %c0_0 = arith.constant 0 : index
    %0 = vector.load %arg0[%c0, %c0_0] : memref<16x16xf32, #tpu.memory_space<vmem>>, vector<16x16xf32>
    %c0_1 = arith.constant 0 : index
    %c0_2 = arith.constant 0 : index
    %1 = vector.load %arg1[%c0_1, %c0_2] : memref<16x256xf32, #tpu.memory_space<vmem>>, vector<16x256xf32>
    %cst = arith.constant dense<0.000000e+00> : vector<16x256xf32>
    %2 = tpu.matmul %0, %1, %cst {dimension_numbers = #tpu.dot_dimension_numbers<[1], [0], [0], [1], [0, 0, 1, 1], [], []>} : vector<16x16xf32>, vector<16x256xf32>, vector<16x256xf32> -> vector<16x256xf32>
    %c0_3 = arith.constant 0 : index
    %c0_4 = arith.constant 0 : index
    %3 = vector.load %arg2[%c0_3, %c0_4] : memref<1x256xf32, #tpu.memory_space<vmem>>, vector<1x256xf32>
    %4 = vector.broadcast %3 : vector<1x256xf32> to vector<16x256xf32>
    %5 = arith.addf %2, %4 : vector<16x256xf32>
    %c0_5 = arith.constant 0 : index
    %c0_6 = arith.constant 0 : index
    %6 = vector.load %arg3[%c0_5, %c0_6] : memref<32x128xf32, #tpu.memory_space<vmem>>, vector<32x128xf32>
    %c0_7 = arith.constant 0 : index
    %c0_8 = arith.constant 0 : index
    %7 = vector.load %arg4[%c0_7, %c0_8] : memref<32x128xf32, #tpu.memory_space<vmem>>, vector<32x128xf32>
    %cst_9 = arith.constant 0.000000e+00 : f32
    %8 = vector.broadcast %cst_9 : f32 to vector<2x32xf32>
    %9 = vector.extract_strided_slice %5 {offsets = [0, 0], sizes = [2, 128], strides = [1, 1]} : vector<16x256xf32> to vector<2x128xf32>
    %10 = vector.extract_strided_slice %5 {offsets = [14, 128], sizes = [2, 128], strides = [1, 1]} : vector<16x256xf32> to vector<2x128xf32>
    %cst_10 = arith.constant dense<0.000000e+00> : vector<2x128xf32>
    %11 = tpu.matmul %8, %6, %cst_10 {dimension_numbers = #tpu.dot_dimension_numbers<[1], [0], [0], [1], [0, 0, 1, 1], [], []>} : vector<2x32xf32>, vector<32x128xf32>, vector<2x128xf32> -> vector<2x128xf32>
    %12 = arith.addf %9, %11 : vector<2x128xf32>
    %cst_11 = arith.constant dense<0.000000e+00> : vector<2x128xf32>
    %13 = tpu.matmul %8, %7, %cst_11 {dimension_numbers = #tpu.dot_dimension_numbers<[1], [0], [0], [1], [0, 0, 1, 1], [], []>} : vector<2x32xf32>, vector<32x128xf32>, vector<2x128xf32> -> vector<2x128xf32>
    %14 = arith.addf %10, %13 : vector<2x128xf32>
    %15 = vector.extract_strided_slice %12 {offsets = [0, 0], sizes = [2, 96], strides = [1, 1]} : vector<2x128xf32> to vector<2x96xf32>
    %16 = arith.negf %15 : vector<2x96xf32>
    %17 = math.exp %16 : vector<2x96xf32>
    %cst_12 = arith.constant 1.000000e+00 : f32
    %18 = vector.broadcast %cst_12 : f32 to vector<2x96xf32>
    %19 = arith.addf %18, %17 : vector<2x96xf32>
    %20 = arith.divf %18, %19 : vector<2x96xf32>
    %21 = vector.extract_strided_slice %20 {offsets = [0, 0], sizes = [2, 32], strides = [1, 1]} : vector<2x96xf32> to vector<2x32xf32>
    %22 = vector.extract_strided_slice %20 {offsets = [0, 32], sizes = [2, 32], strides = [1, 1]} : vector<2x96xf32> to vector<2x32xf32>
    %23 = vector.extract_strided_slice %20 {offsets = [0, 64], sizes = [2, 32], strides = [1, 1]} : vector<2x96xf32> to vector<2x32xf32>
    %24 = vector.extract_strided_slice %12 {offsets = [0, 96], sizes = [2, 32], strides = [1, 1]} : vector<2x128xf32> to vector<2x32xf32>
    %25 = math.tanh %24 : vector<2x32xf32>
    %26 = arith.mulf %22, %8 : vector<2x32xf32>
    %27 = arith.mulf %21, %25 : vector<2x32xf32>
    %28 = arith.addf %26, %27 : vector<2x32xf32>
    %29 = math.tanh %28 : vector<2x32xf32>
    %30 = arith.mulf %23, %29 : vector<2x32xf32>
    %31 = vector.extract_strided_slice %14 {offsets = [0, 0], sizes = [2, 96], strides = [1, 1]} : vector<2x128xf32> to vector<2x96xf32>
    %32 = arith.negf %31 : vector<2x96xf32>
    %33 = math.exp %32 : vector<2x96xf32>
    %cst_13 = arith.constant 1.000000e+00 : f32
    %34 = vector.broadcast %cst_13 : f32 to vector<2x96xf32>
    %35 = arith.addf %34, %33 : vector<2x96xf32>
    %36 = arith.divf %34, %35 : vector<2x96xf32>
    %37 = vector.extract_strided_slice %36 {offsets = [0, 0], sizes = [2, 32], strides = [1, 1]} : vector<2x96xf32> to vector<2x32xf32>
    %38 = vector.extract_strided_slice %36 {offsets = [0, 32], sizes = [2, 32], strides = [1, 1]} : vector<2x96xf32> to vector<2x32xf32>
    %39 = vector.extract_strided_slice %36 {offsets = [0, 64], sizes = [2, 32], strides = [1, 1]} : vector<2x96xf32> to vector<2x32xf32>
    %40 = vector.extract_strided_slice %14 {offsets = [0, 96], sizes = [2, 32], strides = [1, 1]} : vector<2x128xf32> to vector<2x32xf32>
    %41 = math.tanh %40 : vector<2x32xf32>
    %42 = arith.mulf %38, %8 : vector<2x32xf32>
    %43 = arith.mulf %37, %41 : vector<2x32xf32>
    %44 = arith.addf %42, %43 : vector<2x32xf32>
    %45 = math.tanh %44 : vector<2x32xf32>
    %46 = arith.mulf %39, %45 : vector<2x32xf32>
    %c0_14 = arith.constant 0 : index
    %c0_15 = arith.constant 0 : index
    %47 = vector.load %arg10[%c0_14, %c0_15] : memref<2x512xf32, #tpu.memory_space<vmem>>, vector<2x32xf32>
    tpu.vector_store %arg10[%c0_14, %c0_15], %30 {strides = array<i32>} : memref<2x512xf32, #tpu.memory_space<vmem>>, vector<2x32xf32>,
    %c0_16 = arith.constant 0 : index
    %c480 = arith.constant 480 : index
    %48 = vector.load %arg10[%c0_16, %c480] : memref<2x512xf32, #tpu.memory_space<vmem>>, vector<2x32xf32>
    tpu.vector_store %arg10[%c0_16, %c480], %46 {strides = array<i32>} : memref<2x512xf32, #tpu.memory_space<vmem>>, vector<2x32xf32>,
    %49 = vector.extract_strided_slice %5 {offsets = [2, 0], sizes = [2, 128], strides = [1, 1]} : vector<16x256xf32> to vector<2x128xf32>
    %50 = vector.extract_strided_slice %5 {offsets = [12, 128], sizes = [2, 128], strides = [1, 1]} : vector<16x256xf32> to vector<2x128xf32>
    %cst_17 = arith.constant dense<0.000000e+00> : vector<2x128xf32>
    %51 = tpu.matmul %30, %6, %cst_17 {dimension_numbers = #tpu.dot_dimension_numbers<[1], [0], [0], [1], [0, 0, 1, 1], [], []>} : vector<2x32xf32>, vector<32x128xf32>, vector<2x128xf32> -> vector<2x128xf32>
    %52 = arith.addf %49, %51 : vector<2x128xf32>
    %cst_18 = arith.constant dense<0.000000e+00> : vector<2x128xf32>
    %53 = tpu.matmul %46, %7, %cst_18 {dimension_numbers = #tpu.dot_dimension_numbers<[1], [0], [0], [1], [0, 0, 1, 1], [], []>} : vector<2x32xf32>, vector<32x128xf32>, vector<2x128xf32> -> vector<2x128xf32>
    %54 = arith.addf %50, %53 : vector<2x128xf32>
    %55 = vector.extract_strided_slice %52 {offsets = [0, 0], sizes = [2, 96], strides = [1, 1]} : vector<2x128xf32> to vector<2x96xf32>
    %56 = arith.negf %55 : vector<2x96xf32>
    %57 = math.exp %56 : vector<2x96xf32>
    %cst_19 = arith.constant 1.000000e+00 : f32
    %58 = vector.broadcast %cst_19 : f32 to vector<2x96xf32>
    %59 = arith.addf %58, %57 : vector<2x96xf32>
    %60 = arith.divf %58, %59 : vector<2x96xf32>
    %61 = vector.extract_strided_slice %60 {offsets = [0, 0], sizes = [2, 32], strides = [1, 1]} : vector<2x96xf32> to vector<2x32xf32>
    %62 = vector.extract_strided_slice %60 {offsets = [0, 32], sizes = [2, 32], strides = [1, 1]} : vector<2x96xf32> to vector<2x32xf32>
    %63 = vector.extract_strided_slice %60 {offsets = [0, 64], sizes = [2, 32], strides = [1, 1]} : vector<2x96xf32> to vector<2x32xf32>
    %64 = vector.extract_strided_slice %52 {offsets = [0, 96], sizes = [2, 32], strides = [1, 1]} : vector<2x128xf32> to vector<2x32xf32>
    %65 = math.tanh %64 : vector<2x32xf32>
    %66 = arith.mulf %62, %28 : vector<2x32xf32>
    %67 = arith.mulf %61, %65 : vector<2x32xf32>
    %68 = arith.addf %66, %67 : vector<2x32xf32>
    %69 = math.tanh %68 : vector<2x32xf32>
    %70 = arith.mulf %63, %69 : vector<2x32xf32>
    %71 = vector.extract_strided_slice %54 {offsets = [0, 0], sizes = [2, 96], strides = [1, 1]} : vector<2x128xf32> to vector<2x96xf32>
    %72 = arith.negf %71 : vector<2x96xf32>
    %73 = math.exp %72 : vector<2x96xf32>
    %cst_20 = arith.constant 1.000000e+00 : f32
    %74 = vector.broadcast %cst_20 : f32 to vector<2x96xf32>
    %75 = arith.addf %74, %73 : vector<2x96xf32>
    %76 = arith.divf %74, %75 : vector<2x96xf32>
    %77 = vector.extract_strided_slice %76 {offsets = [0, 0], sizes = [2, 32], strides = [1, 1]} : vector<2x96xf32> to vector<2x32xf32>
    %78 = vector.extract_strided_slice %76 {offsets = [0, 32], sizes = [2, 32], strides = [1, 1]} : vector<2x96xf32> to vector<2x32xf32>
    %79 = vector.extract_strided_slice %76 {offsets = [0, 64], sizes = [2, 32], strides = [1, 1]} : vector<2x96xf32> to vector<2x32xf32>
    %80 = vector.extract_strided_slice %54 {offsets = [0, 96], sizes = [2, 32], strides = [1, 1]} : vector<2x128xf32> to vector<2x32xf32>
    %81 = math.tanh %80 : vector<2x32xf32>
    %82 = arith.mulf %78, %44 : vector<2x32xf32>
    %83 = arith.mulf %77, %81 : vector<2x32xf32>
    %84 = arith.addf %82, %83 : vector<2x32xf32>
    %85 = math.tanh %84 : vector<2x32xf32>
    %86 = arith.mulf %79, %85 : vector<2x32xf32>
    %c0_21 = arith.constant 0 : index
    %c64 = arith.constant 64 : index
    %87 = vector.load %arg10[%c0_21, %c64] : memref<2x512xf32, #tpu.memory_space<vmem>>, vector<2x32xf32>
    tpu.vector_store %arg10[%c0_21, %c64], %70 {strides = array<i32>} : memref<2x512xf32, #tpu.memory_space<vmem>>, vector<2x32xf32>,
    %c0_22 = arith.constant 0 : index
    %c416 = arith.constant 416 : index
    %88 = vector.load %arg10[%c0_22, %c416] : memref<2x512xf32, #tpu.memory_space<vmem>>, vector<2x32xf32>
    tpu.vector_store %arg10[%c0_22, %c416], %86 {strides = array<i32>} : memref<2x512xf32, #tpu.memory_space<vmem>>, vector<2x32xf32>,
    %89 = vector.extract_strided_slice %5 {offsets = [4, 0], sizes = [2, 128], strides = [1, 1]} : vector<16x256xf32> to vector<2x128xf32>
    %90 = vector.extract_strided_slice %5 {offsets = [10, 128], sizes = [2, 128], strides = [1, 1]} : vector<16x256xf32> to vector<2x128xf32>
    %cst_23 = arith.constant dense<0.000000e+00> : vector<2x128xf32>
    %91 = tpu.matmul %70, %6, %cst_23 {dimension_numbers = #tpu.dot_dimension_numbers<[1], [0], [0], [1], [0, 0, 1, 1], [], []>} : vector<2x32xf32>, vector<32x128xf32>, vector<2x128xf32> -> vector<2x128xf32>
    %92 = arith.addf %89, %91 : vector<2x128xf32>
    %cst_24 = arith.constant dense<0.000000e+00> : vector<2x128xf32>
    %93 = tpu.matmul %86, %7, %cst_24 {dimension_numbers = #tpu.dot_dimension_numbers<[1], [0], [0], [1], [0, 0, 1, 1], [], []>} : vector<2x32xf32>, vector<32x128xf32>, vector<2x128xf32> -> vector<2x128xf32>
    %94 = arith.addf %90, %93 : vector<2x128xf32>
    %95 = vector.extract_strided_slice %92 {offsets = [0, 0], sizes = [2, 96], strides = [1, 1]} : vector<2x128xf32> to vector<2x96xf32>
    %96 = arith.negf %95 : vector<2x96xf32>
    %97 = math.exp %96 : vector<2x96xf32>
    %cst_25 = arith.constant 1.000000e+00 : f32
    %98 = vector.broadcast %cst_25 : f32 to vector<2x96xf32>
    %99 = arith.addf %98, %97 : vector<2x96xf32>
    %100 = arith.divf %98, %99 : vector<2x96xf32>
    %101 = vector.extract_strided_slice %100 {offsets = [0, 0], sizes = [2, 32], strides = [1, 1]} : vector<2x96xf32> to vector<2x32xf32>
    %102 = vector.extract_strided_slice %100 {offsets = [0, 32], sizes = [2, 32], strides = [1, 1]} : vector<2x96xf32> to vector<2x32xf32>
    %103 = vector.extract_strided_slice %100 {offsets = [0, 64], sizes = [2, 32], strides = [1, 1]} : vector<2x96xf32> to vector<2x32xf32>
    %104 = vector.extract_strided_slice %92 {offsets = [0, 96], sizes = [2, 32], strides = [1, 1]} : vector<2x128xf32> to vector<2x32xf32>
    %105 = math.tanh %104 : vector<2x32xf32>
    %106 = arith.mulf %102, %68 : vector<2x32xf32>
    %107 = arith.mulf %101, %105 : vector<2x32xf32>
    %108 = arith.addf %106, %107 : vector<2x32xf32>
    %109 = math.tanh %108 : vector<2x32xf32>
    %110 = arith.mulf %103, %109 : vector<2x32xf32>
    %111 = vector.extract_strided_slice %94 {offsets = [0, 0], sizes = [2, 96], strides = [1, 1]} : vector<2x128xf32> to vector<2x96xf32>
    %112 = arith.negf %111 : vector<2x96xf32>
    %113 = math.exp %112 : vector<2x96xf32>
    %cst_26 = arith.constant 1.000000e+00 : f32
    %114 = vector.broadcast %cst_26 : f32 to vector<2x96xf32>
    %115 = arith.addf %114, %113 : vector<2x96xf32>
    %116 = arith.divf %114, %115 : vector<2x96xf32>
    %117 = vector.extract_strided_slice %116 {offsets = [0, 0], sizes = [2, 32], strides = [1, 1]} : vector<2x96xf32> to vector<2x32xf32>
    %118 = vector.extract_strided_slice %116 {offsets = [0, 32], sizes = [2, 32], strides = [1, 1]} : vector<2x96xf32> to vector<2x32xf32>
    %119 = vector.extract_strided_slice %116 {offsets = [0, 64], sizes = [2, 32], strides = [1, 1]} : vector<2x96xf32> to vector<2x32xf32>
    %120 = vector.extract_strided_slice %94 {offsets = [0, 96], sizes = [2, 32], strides = [1, 1]} : vector<2x128xf32> to vector<2x32xf32>
    %121 = math.tanh %120 : vector<2x32xf32>
    %122 = arith.mulf %118, %84 : vector<2x32xf32>
    %123 = arith.mulf %117, %121 : vector<2x32xf32>
    %124 = arith.addf %122, %123 : vector<2x32xf32>
    %125 = math.tanh %124 : vector<2x32xf32>
    %126 = arith.mulf %119, %125 : vector<2x32xf32>
    %c0_27 = arith.constant 0 : index
    %c128 = arith.constant 128 : index
    %127 = vector.load %arg10[%c0_27, %c128] : memref<2x512xf32, #tpu.memory_space<vmem>>, vector<2x32xf32>
    tpu.vector_store %arg10[%c0_27, %c128], %110 {strides = array<i32>} : memref<2x512xf32, #tpu.memory_space<vmem>>, vector<2x32xf32>,
    %c0_28 = arith.constant 0 : index
    %c352 = arith.constant 352 : index
    %128 = vector.load %arg10[%c0_28, %c352] : memref<2x512xf32, #tpu.memory_space<vmem>>, vector<2x32xf32>
    tpu.vector_store %arg10[%c0_28, %c352], %126 {strides = array<i32>} : memref<2x512xf32, #tpu.memory_space<vmem>>, vector<2x32xf32>,
    %129 = vector.extract_strided_slice %5 {offsets = [6, 0], sizes = [2, 128], strides = [1, 1]} : vector<16x256xf32> to vector<2x128xf32>
    %130 = vector.extract_strided_slice %5 {offsets = [8, 128], sizes = [2, 128], strides = [1, 1]} : vector<16x256xf32> to vector<2x128xf32>
    %cst_29 = arith.constant dense<0.000000e+00> : vector<2x128xf32>
    %131 = tpu.matmul %110, %6, %cst_29 {dimension_numbers = #tpu.dot_dimension_numbers<[1], [0], [0], [1], [0, 0, 1, 1], [], []>} : vector<2x32xf32>, vector<32x128xf32>, vector<2x128xf32> -> vector<2x128xf32>
    %132 = arith.addf %129, %131 : vector<2x128xf32>
    %cst_30 = arith.constant dense<0.000000e+00> : vector<2x128xf32>
    %133 = tpu.matmul %126, %7, %cst_30 {dimension_numbers = #tpu.dot_dimension_numbers<[1], [0], [0], [1], [0, 0, 1, 1], [], []>} : vector<2x32xf32>, vector<32x128xf32>, vector<2x128xf32> -> vector<2x128xf32>
    %134 = arith.addf %130, %133 : vector<2x128xf32>
    %135 = vector.extract_strided_slice %132 {offsets = [0, 0], sizes = [2, 96], strides = [1, 1]} : vector<2x128xf32> to vector<2x96xf32>
    %136 = arith.negf %135 : vector<2x96xf32>
    %137 = math.exp %136 : vector<2x96xf32>
    %cst_31 = arith.constant 1.000000e+00 : f32
    %138 = vector.broadcast %cst_31 : f32 to vector<2x96xf32>
    %139 = arith.addf %138, %137 : vector<2x96xf32>
    %140 = arith.divf %138, %139 : vector<2x96xf32>
    %141 = vector.extract_strided_slice %140 {offsets = [0, 0], sizes = [2, 32], strides = [1, 1]} : vector<2x96xf32> to vector<2x32xf32>
    %142 = vector.extract_strided_slice %140 {offsets = [0, 32], sizes = [2, 32], strides = [1, 1]} : vector<2x96xf32> to vector<2x32xf32>
    %143 = vector.extract_strided_slice %140 {offsets = [0, 64], sizes = [2, 32], strides = [1, 1]} : vector<2x96xf32> to vector<2x32xf32>
    %144 = vector.extract_strided_slice %132 {offsets = [0, 96], sizes = [2, 32], strides = [1, 1]} : vector<2x128xf32> to vector<2x32xf32>
    %145 = math.tanh %144 : vector<2x32xf32>
    %146 = arith.mulf %142, %108 : vector<2x32xf32>
    %147 = arith.mulf %141, %145 : vector<2x32xf32>
    %148 = arith.addf %146, %147 : vector<2x32xf32>
    %149 = math.tanh %148 : vector<2x32xf32>
    %150 = arith.mulf %143, %149 : vector<2x32xf32>
    %151 = vector.extract_strided_slice %134 {offsets = [0, 0], sizes = [2, 96], strides = [1, 1]} : vector<2x128xf32> to vector<2x96xf32>
    %152 = arith.negf %151 : vector<2x96xf32>
    %153 = math.exp %152 : vector<2x96xf32>
    %cst_32 = arith.constant 1.000000e+00 : f32
    %154 = vector.broadcast %cst_32 : f32 to vector<2x96xf32>
    %155 = arith.addf %154, %153 : vector<2x96xf32>
    %156 = arith.divf %154, %155 : vector<2x96xf32>
    %157 = vector.extract_strided_slice %156 {offsets = [0, 0], sizes = [2, 32], strides = [1, 1]} : vector<2x96xf32> to vector<2x32xf32>
    %158 = vector.extract_strided_slice %156 {offsets = [0, 32], sizes = [2, 32], strides = [1, 1]} : vector<2x96xf32> to vector<2x32xf32>
    %159 = vector.extract_strided_slice %156 {offsets = [0, 64], sizes = [2, 32], strides = [1, 1]} : vector<2x96xf32> to vector<2x32xf32>
    %160 = vector.extract_strided_slice %134 {offsets = [0, 96], sizes = [2, 32], strides = [1, 1]} : vector<2x128xf32> to vector<2x32xf32>
    %161 = math.tanh %160 : vector<2x32xf32>
    %162 = arith.mulf %158, %124 : vector<2x32xf32>
    %163 = arith.mulf %157, %161 : vector<2x32xf32>
    %164 = arith.addf %162, %163 : vector<2x32xf32>
    %165 = math.tanh %164 : vector<2x32xf32>
    %166 = arith.mulf %159, %165 : vector<2x32xf32>
    %c0_33 = arith.constant 0 : index
    %c192 = arith.constant 192 : index
    %167 = vector.load %arg10[%c0_33, %c192] : memref<2x512xf32, #tpu.memory_space<vmem>>, vector<2x32xf32>
    tpu.vector_store %arg10[%c0_33, %c192], %150 {strides = array<i32>} : memref<2x512xf32, #tpu.memory_space<vmem>>, vector<2x32xf32>,
    %c0_34 = arith.constant 0 : index
    %c288 = arith.constant 288 : index
    %168 = vector.load %arg10[%c0_34, %c288] : memref<2x512xf32, #tpu.memory_space<vmem>>, vector<2x32xf32>
    tpu.vector_store %arg10[%c0_34, %c288], %166 {strides = array<i32>} : memref<2x512xf32, #tpu.memory_space<vmem>>, vector<2x32xf32>,
    %169 = vector.extract_strided_slice %5 {offsets = [8, 0], sizes = [2, 128], strides = [1, 1]} : vector<16x256xf32> to vector<2x128xf32>
    %170 = vector.extract_strided_slice %5 {offsets = [6, 128], sizes = [2, 128], strides = [1, 1]} : vector<16x256xf32> to vector<2x128xf32>
    %cst_35 = arith.constant dense<0.000000e+00> : vector<2x128xf32>
    %171 = tpu.matmul %150, %6, %cst_35 {dimension_numbers = #tpu.dot_dimension_numbers<[1], [0], [0], [1], [0, 0, 1, 1], [], []>} : vector<2x32xf32>, vector<32x128xf32>, vector<2x128xf32> -> vector<2x128xf32>
    %172 = arith.addf %169, %171 : vector<2x128xf32>
    %cst_36 = arith.constant dense<0.000000e+00> : vector<2x128xf32>
    %173 = tpu.matmul %166, %7, %cst_36 {dimension_numbers = #tpu.dot_dimension_numbers<[1], [0], [0], [1], [0, 0, 1, 1], [], []>} : vector<2x32xf32>, vector<32x128xf32>, vector<2x128xf32> -> vector<2x128xf32>
    %174 = arith.addf %170, %173 : vector<2x128xf32>
    %175 = vector.extract_strided_slice %172 {offsets = [0, 0], sizes = [2, 96], strides = [1, 1]} : vector<2x128xf32> to vector<2x96xf32>
    %176 = arith.negf %175 : vector<2x96xf32>
    %177 = math.exp %176 : vector<2x96xf32>
    %cst_37 = arith.constant 1.000000e+00 : f32
    %178 = vector.broadcast %cst_37 : f32 to vector<2x96xf32>
    %179 = arith.addf %178, %177 : vector<2x96xf32>
    %180 = arith.divf %178, %179 : vector<2x96xf32>
    %181 = vector.extract_strided_slice %180 {offsets = [0, 0], sizes = [2, 32], strides = [1, 1]} : vector<2x96xf32> to vector<2x32xf32>
    %182 = vector.extract_strided_slice %180 {offsets = [0, 32], sizes = [2, 32], strides = [1, 1]} : vector<2x96xf32> to vector<2x32xf32>
    %183 = vector.extract_strided_slice %180 {offsets = [0, 64], sizes = [2, 32], strides = [1, 1]} : vector<2x96xf32> to vector<2x32xf32>
    %184 = vector.extract_strided_slice %172 {offsets = [0, 96], sizes = [2, 32], strides = [1, 1]} : vector<2x128xf32> to vector<2x32xf32>
    %185 = math.tanh %184 : vector<2x32xf32>
    %186 = arith.mulf %182, %148 : vector<2x32xf32>
    %187 = arith.mulf %181, %185 : vector<2x32xf32>
    %188 = arith.addf %186, %187 : vector<2x32xf32>
    %189 = math.tanh %188 : vector<2x32xf32>
    %190 = arith.mulf %183, %189 : vector<2x32xf32>
    %191 = vector.extract_strided_slice %174 {offsets = [0, 0], sizes = [2, 96], strides = [1, 1]} : vector<2x128xf32> to vector<2x96xf32>
    %192 = arith.negf %191 : vector<2x96xf32>
    %193 = math.exp %192 : vector<2x96xf32>
    %cst_38 = arith.constant 1.000000e+00 : f32
    %194 = vector.broadcast %cst_38 : f32 to vector<2x96xf32>
    %195 = arith.addf %194, %193 : vector<2x96xf32>
    %196 = arith.divf %194, %195 : vector<2x96xf32>
    %197 = vector.extract_strided_slice %196 {offsets = [0, 0], sizes = [2, 32], strides = [1, 1]} : vector<2x96xf32> to vector<2x32xf32>
    %198 = vector.extract_strided_slice %196 {offsets = [0, 32], sizes = [2, 32], strides = [1, 1]} : vector<2x96xf32> to vector<2x32xf32>
    %199 = vector.extract_strided_slice %196 {offsets = [0, 64], sizes = [2, 32], strides = [1, 1]} : vector<2x96xf32> to vector<2x32xf32>
    %200 = vector.extract_strided_slice %174 {offsets = [0, 96], sizes = [2, 32], strides = [1, 1]} : vector<2x128xf32> to vector<2x32xf32>
    %201 = math.tanh %200 : vector<2x32xf32>
    %202 = arith.mulf %198, %164 : vector<2x32xf32>
    %203 = arith.mulf %197, %201 : vector<2x32xf32>
    %204 = arith.addf %202, %203 : vector<2x32xf32>
    %205 = math.tanh %204 : vector<2x32xf32>
    %206 = arith.mulf %199, %205 : vector<2x32xf32>
    %c0_39 = arith.constant 0 : index
    %c256 = arith.constant 256 : index
    %207 = vector.load %arg10[%c0_39, %c256] : memref<2x512xf32, #tpu.memory_space<vmem>>, vector<2x32xf32>
    tpu.vector_store %arg10[%c0_39, %c256], %190 {strides = array<i32>} : memref<2x512xf32, #tpu.memory_space<vmem>>, vector<2x32xf32>,
    %c0_40 = arith.constant 0 : index
    %c224 = arith.constant 224 : index
    %208 = vector.load %arg10[%c0_40, %c224] : memref<2x512xf32, #tpu.memory_space<vmem>>, vector<2x32xf32>
    tpu.vector_store %arg10[%c0_40, %c224], %206 {strides = array<i32>} : memref<2x512xf32, #tpu.memory_space<vmem>>, vector<2x32xf32>,
    %209 = vector.extract_strided_slice %5 {offsets = [10, 0], sizes = [2, 128], strides = [1, 1]} : vector<16x256xf32> to vector<2x128xf32>
    %210 = vector.extract_strided_slice %5 {offsets = [4, 128], sizes = [2, 128], strides = [1, 1]} : vector<16x256xf32> to vector<2x128xf32>
    %cst_41 = arith.constant dense<0.000000e+00> : vector<2x128xf32>
    %211 = tpu.matmul %190, %6, %cst_41 {dimension_numbers = #tpu.dot_dimension_numbers<[1], [0], [0], [1], [0, 0, 1, 1], [], []>} : vector<2x32xf32>, vector<32x128xf32>, vector<2x128xf32> -> vector<2x128xf32>
    %212 = arith.addf %209, %211 : vector<2x128xf32>
    %cst_42 = arith.constant dense<0.000000e+00> : vector<2x128xf32>
    %213 = tpu.matmul %206, %7, %cst_42 {dimension_numbers = #tpu.dot_dimension_numbers<[1], [0], [0], [1], [0, 0, 1, 1], [], []>} : vector<2x32xf32>, vector<32x128xf32>, vector<2x128xf32> -> vector<2x128xf32>
    %214 = arith.addf %210, %213 : vector<2x128xf32>
    %215 = vector.extract_strided_slice %212 {offsets = [0, 0], sizes = [2, 96], strides = [1, 1]} : vector<2x128xf32> to vector<2x96xf32>
    %216 = arith.negf %215 : vector<2x96xf32>
    %217 = math.exp %216 : vector<2x96xf32>
    %cst_43 = arith.constant 1.000000e+00 : f32
    %218 = vector.broadcast %cst_43 : f32 to vector<2x96xf32>
    %219 = arith.addf %218, %217 : vector<2x96xf32>
    %220 = arith.divf %218, %219 : vector<2x96xf32>
    %221 = vector.extract_strided_slice %220 {offsets = [0, 0], sizes = [2, 32], strides = [1, 1]} : vector<2x96xf32> to vector<2x32xf32>
    %222 = vector.extract_strided_slice %220 {offsets = [0, 32], sizes = [2, 32], strides = [1, 1]} : vector<2x96xf32> to vector<2x32xf32>
    %223 = vector.extract_strided_slice %220 {offsets = [0, 64], sizes = [2, 32], strides = [1, 1]} : vector<2x96xf32> to vector<2x32xf32>
    %224 = vector.extract_strided_slice %212 {offsets = [0, 96], sizes = [2, 32], strides = [1, 1]} : vector<2x128xf32> to vector<2x32xf32>
    %225 = math.tanh %224 : vector<2x32xf32>
    %226 = arith.mulf %222, %188 : vector<2x32xf32>
    %227 = arith.mulf %221, %225 : vector<2x32xf32>
    %228 = arith.addf %226, %227 : vector<2x32xf32>
    %229 = math.tanh %228 : vector<2x32xf32>
    %230 = arith.mulf %223, %229 : vector<2x32xf32>
    %231 = vector.extract_strided_slice %214 {offsets = [0, 0], sizes = [2, 96], strides = [1, 1]} : vector<2x128xf32> to vector<2x96xf32>
    %232 = arith.negf %231 : vector<2x96xf32>
    %233 = math.exp %232 : vector<2x96xf32>
    %cst_44 = arith.constant 1.000000e+00 : f32
    %234 = vector.broadcast %cst_44 : f32 to vector<2x96xf32>
    %235 = arith.addf %234, %233 : vector<2x96xf32>
    %236 = arith.divf %234, %235 : vector<2x96xf32>
    %237 = vector.extract_strided_slice %236 {offsets = [0, 0], sizes = [2, 32], strides = [1, 1]} : vector<2x96xf32> to vector<2x32xf32>
    %238 = vector.extract_strided_slice %236 {offsets = [0, 32], sizes = [2, 32], strides = [1, 1]} : vector<2x96xf32> to vector<2x32xf32>
    %239 = vector.extract_strided_slice %236 {offsets = [0, 64], sizes = [2, 32], strides = [1, 1]} : vector<2x96xf32> to vector<2x32xf32>
    %240 = vector.extract_strided_slice %214 {offsets = [0, 96], sizes = [2, 32], strides = [1, 1]} : vector<2x128xf32> to vector<2x32xf32>
    %241 = math.tanh %240 : vector<2x32xf32>
    %242 = arith.mulf %238, %204 : vector<2x32xf32>
    %243 = arith.mulf %237, %241 : vector<2x32xf32>
    %244 = arith.addf %242, %243 : vector<2x32xf32>
    %245 = math.tanh %244 : vector<2x32xf32>
    %246 = arith.mulf %239, %245 : vector<2x32xf32>
    %c0_45 = arith.constant 0 : index
    %c320 = arith.constant 320 : index
    %247 = vector.load %arg10[%c0_45, %c320] : memref<2x512xf32, #tpu.memory_space<vmem>>, vector<2x32xf32>
    tpu.vector_store %arg10[%c0_45, %c320], %230 {strides = array<i32>} : memref<2x512xf32, #tpu.memory_space<vmem>>, vector<2x32xf32>,
    %c0_46 = arith.constant 0 : index
    %c160 = arith.constant 160 : index
    %248 = vector.load %arg10[%c0_46, %c160] : memref<2x512xf32, #tpu.memory_space<vmem>>, vector<2x32xf32>
    tpu.vector_store %arg10[%c0_46, %c160], %246 {strides = array<i32>} : memref<2x512xf32, #tpu.memory_space<vmem>>, vector<2x32xf32>,
    %249 = vector.extract_strided_slice %5 {offsets = [12, 0], sizes = [2, 128], strides = [1, 1]} : vector<16x256xf32> to vector<2x128xf32>
    %250 = vector.extract_strided_slice %5 {offsets = [2, 128], sizes = [2, 128], strides = [1, 1]} : vector<16x256xf32> to vector<2x128xf32>
    %cst_47 = arith.constant dense<0.000000e+00> : vector<2x128xf32>
    %251 = tpu.matmul %230, %6, %cst_47 {dimension_numbers = #tpu.dot_dimension_numbers<[1], [0], [0], [1], [0, 0, 1, 1], [], []>} : vector<2x32xf32>, vector<32x128xf32>, vector<2x128xf32> -> vector<2x128xf32>
    %252 = arith.addf %249, %251 : vector<2x128xf32>
    %cst_48 = arith.constant dense<0.000000e+00> : vector<2x128xf32>
    %253 = tpu.matmul %246, %7, %cst_48 {dimension_numbers = #tpu.dot_dimension_numbers<[1], [0], [0], [1], [0, 0, 1, 1], [], []>} : vector<2x32xf32>, vector<32x128xf32>, vector<2x128xf32> -> vector<2x128xf32>
    %254 = arith.addf %250, %253 : vector<2x128xf32>
    %255 = vector.extract_strided_slice %252 {offsets = [0, 0], sizes = [2, 96], strides = [1, 1]} : vector<2x128xf32> to vector<2x96xf32>
    %256 = arith.negf %255 : vector<2x96xf32>
    %257 = math.exp %256 : vector<2x96xf32>
    %cst_49 = arith.constant 1.000000e+00 : f32
    %258 = vector.broadcast %cst_49 : f32 to vector<2x96xf32>
    %259 = arith.addf %258, %257 : vector<2x96xf32>
    %260 = arith.divf %258, %259 : vector<2x96xf32>
    %261 = vector.extract_strided_slice %260 {offsets = [0, 0], sizes = [2, 32], strides = [1, 1]} : vector<2x96xf32> to vector<2x32xf32>
    %262 = vector.extract_strided_slice %260 {offsets = [0, 32], sizes = [2, 32], strides = [1, 1]} : vector<2x96xf32> to vector<2x32xf32>
    %263 = vector.extract_strided_slice %260 {offsets = [0, 64], sizes = [2, 32], strides = [1, 1]} : vector<2x96xf32> to vector<2x32xf32>
    %264 = vector.extract_strided_slice %252 {offsets = [0, 96], sizes = [2, 32], strides = [1, 1]} : vector<2x128xf32> to vector<2x32xf32>
    %265 = math.tanh %264 : vector<2x32xf32>
    %266 = arith.mulf %262, %228 : vector<2x32xf32>
    %267 = arith.mulf %261, %265 : vector<2x32xf32>
    %268 = arith.addf %266, %267 : vector<2x32xf32>
    %269 = math.tanh %268 : vector<2x32xf32>
    %270 = arith.mulf %263, %269 : vector<2x32xf32>
    %271 = vector.extract_strided_slice %254 {offsets = [0, 0], sizes = [2, 96], strides = [1, 1]} : vector<2x128xf32> to vector<2x96xf32>
    %272 = arith.negf %271 : vector<2x96xf32>
    %273 = math.exp %272 : vector<2x96xf32>
    %cst_50 = arith.constant 1.000000e+00 : f32
    %274 = vector.broadcast %cst_50 : f32 to vector<2x96xf32>
    %275 = arith.addf %274, %273 : vector<2x96xf32>
    %276 = arith.divf %274, %275 : vector<2x96xf32>
    %277 = vector.extract_strided_slice %276 {offsets = [0, 0], sizes = [2, 32], strides = [1, 1]} : vector<2x96xf32> to vector<2x32xf32>
    %278 = vector.extract_strided_slice %276 {offsets = [0, 32], sizes = [2, 32], strides = [1, 1]} : vector<2x96xf32> to vector<2x32xf32>
    %279 = vector.extract_strided_slice %276 {offsets = [0, 64], sizes = [2, 32], strides = [1, 1]} : vector<2x96xf32> to vector<2x32xf32>
    %280 = vector.extract_strided_slice %254 {offsets = [0, 96], sizes = [2, 32], strides = [1, 1]} : vector<2x128xf32> to vector<2x32xf32>
    %281 = math.tanh %280 : vector<2x32xf32>
    %282 = arith.mulf %278, %244 : vector<2x32xf32>
    %283 = arith.mulf %277, %281 : vector<2x32xf32>
    %284 = arith.addf %282, %283 : vector<2x32xf32>
    %285 = math.tanh %284 : vector<2x32xf32>
    %286 = arith.mulf %279, %285 : vector<2x32xf32>
    %c0_51 = arith.constant 0 : index
    %c384 = arith.constant 384 : index
    %287 = vector.load %arg10[%c0_51, %c384] : memref<2x512xf32, #tpu.memory_space<vmem>>, vector<2x32xf32>
    tpu.vector_store %arg10[%c0_51, %c384], %270 {strides = array<i32>} : memref<2x512xf32, #tpu.memory_space<vmem>>, vector<2x32xf32>,
    %c0_52 = arith.constant 0 : index
    %c96 = arith.constant 96 : index
    %288 = vector.load %arg10[%c0_52, %c96] : memref<2x512xf32, #tpu.memory_space<vmem>>, vector<2x32xf32>
    tpu.vector_store %arg10[%c0_52, %c96], %286 {strides = array<i32>} : memref<2x512xf32, #tpu.memory_space<vmem>>, vector<2x32xf32>,
    %289 = vector.extract_strided_slice %5 {offsets = [14, 0], sizes = [2, 128], strides = [1, 1]} : vector<16x256xf32> to vector<2x128xf32>
    %290 = vector.extract_strided_slice %5 {offsets = [0, 128], sizes = [2, 128], strides = [1, 1]} : vector<16x256xf32> to vector<2x128xf32>
    %cst_53 = arith.constant dense<0.000000e+00> : vector<2x128xf32>
    %291 = tpu.matmul %270, %6, %cst_53 {dimension_numbers = #tpu.dot_dimension_numbers<[1], [0], [0], [1], [0, 0, 1, 1], [], []>} : vector<2x32xf32>, vector<32x128xf32>, vector<2x128xf32> -> vector<2x128xf32>
    %292 = arith.addf %289, %291 : vector<2x128xf32>
    %cst_54 = arith.constant dense<0.000000e+00> : vector<2x128xf32>
    %293 = tpu.matmul %286, %7, %cst_54 {dimension_numbers = #tpu.dot_dimension_numbers<[1], [0], [0], [1], [0, 0, 1, 1], [], []>} : vector<2x32xf32>, vector<32x128xf32>, vector<2x128xf32> -> vector<2x128xf32>
    %294 = arith.addf %290, %293 : vector<2x128xf32>
    %295 = vector.extract_strided_slice %292 {offsets = [0, 0], sizes = [2, 96], strides = [1, 1]} : vector<2x128xf32> to vector<2x96xf32>
    %296 = arith.negf %295 : vector<2x96xf32>
    %297 = math.exp %296 : vector<2x96xf32>
    %cst_55 = arith.constant 1.000000e+00 : f32
    %298 = vector.broadcast %cst_55 : f32 to vector<2x96xf32>
    %299 = arith.addf %298, %297 : vector<2x96xf32>
    %300 = arith.divf %298, %299 : vector<2x96xf32>
    %301 = vector.extract_strided_slice %300 {offsets = [0, 0], sizes = [2, 32], strides = [1, 1]} : vector<2x96xf32> to vector<2x32xf32>
    %302 = vector.extract_strided_slice %300 {offsets = [0, 32], sizes = [2, 32], strides = [1, 1]} : vector<2x96xf32> to vector<2x32xf32>
    %303 = vector.extract_strided_slice %300 {offsets = [0, 64], sizes = [2, 32], strides = [1, 1]} : vector<2x96xf32> to vector<2x32xf32>
    %304 = vector.extract_strided_slice %292 {offsets = [0, 96], sizes = [2, 32], strides = [1, 1]} : vector<2x128xf32> to vector<2x32xf32>
    %305 = math.tanh %304 : vector<2x32xf32>
    %306 = arith.mulf %302, %268 : vector<2x32xf32>
    %307 = arith.mulf %301, %305 : vector<2x32xf32>
    %308 = arith.addf %306, %307 : vector<2x32xf32>
    %309 = math.tanh %308 : vector<2x32xf32>
    %310 = arith.mulf %303, %309 : vector<2x32xf32>
    %311 = vector.extract_strided_slice %294 {offsets = [0, 0], sizes = [2, 96], strides = [1, 1]} : vector<2x128xf32> to vector<2x96xf32>
    %312 = arith.negf %311 : vector<2x96xf32>
    %313 = math.exp %312 : vector<2x96xf32>
    %cst_56 = arith.constant 1.000000e+00 : f32
    %314 = vector.broadcast %cst_56 : f32 to vector<2x96xf32>
    %315 = arith.addf %314, %313 : vector<2x96xf32>
    %316 = arith.divf %314, %315 : vector<2x96xf32>
    %317 = vector.extract_strided_slice %316 {offsets = [0, 0], sizes = [2, 32], strides = [1, 1]} : vector<2x96xf32> to vector<2x32xf32>
    %318 = vector.extract_strided_slice %316 {offsets = [0, 32], sizes = [2, 32], strides = [1, 1]} : vector<2x96xf32> to vector<2x32xf32>
    %319 = vector.extract_strided_slice %316 {offsets = [0, 64], sizes = [2, 32], strides = [1, 1]} : vector<2x96xf32> to vector<2x32xf32>
    %320 = vector.extract_strided_slice %294 {offsets = [0, 96], sizes = [2, 32], strides = [1, 1]} : vector<2x128xf32> to vector<2x32xf32>
    %321 = math.tanh %320 : vector<2x32xf32>
    %322 = arith.mulf %318, %284 : vector<2x32xf32>
    %323 = arith.mulf %317, %321 : vector<2x32xf32>
    %324 = arith.addf %322, %323 : vector<2x32xf32>
    %325 = math.tanh %324 : vector<2x32xf32>
    %326 = arith.mulf %319, %325 : vector<2x32xf32>
    %c0_57 = arith.constant 0 : index
    %c448 = arith.constant 448 : index
    %327 = vector.load %arg10[%c0_57, %c448] : memref<2x512xf32, #tpu.memory_space<vmem>>, vector<2x32xf32>
    tpu.vector_store %arg10[%c0_57, %c448], %310 {strides = array<i32>} : memref<2x512xf32, #tpu.memory_space<vmem>>, vector<2x32xf32>,
    %c0_58 = arith.constant 0 : index
    %c32 = arith.constant 32 : index
    %328 = vector.load %arg10[%c0_58, %c32] : memref<2x512xf32, #tpu.memory_space<vmem>>, vector<2x32xf32>
    tpu.vector_store %arg10[%c0_58, %c32], %326 {strides = array<i32>} : memref<2x512xf32, #tpu.memory_space<vmem>>, vector<2x32xf32>,
    %c0_59 = arith.constant 0 : index
    %c0_60 = arith.constant 0 : index
    %329 = vector.load %arg10[%c0_59, %c0_60] : memref<2x512xf32, #tpu.memory_space<vmem>>, vector<2x512xf32>
    %c0_61 = arith.constant 0 : index
    %c0_62 = arith.constant 0 : index
    %330 = vector.load %arg5[%c0_61, %c0_62] : memref<512x32xf32, #tpu.memory_space<vmem>>, vector<512x32xf32>
    %cst_63 = arith.constant dense<0.000000e+00> : vector<2x32xf32>
    %331 = tpu.matmul %329, %330, %cst_63 {dimension_numbers = #tpu.dot_dimension_numbers<[1], [0], [0], [1], [0, 0, 1, 1], [], []>} : vector<2x512xf32>, vector<512x32xf32>, vector<2x32xf32> -> vector<2x32xf32>
    %c0_64 = arith.constant 0 : index
    %c0_65 = arith.constant 0 : index
    %332 = vector.load %arg6[%c0_64, %c0_65] : memref<1x32xf32, #tpu.memory_space<vmem>>, vector<1x32xf32>
    %333 = vector.broadcast %332 : vector<1x32xf32> to vector<2x32xf32>
    %334 = arith.addf %331, %333 : vector<2x32xf32>
    %cst_66 = arith.constant 0.000000e+00 : f32
    %335 = vector.broadcast %cst_66 : f32 to vector<2x32xf32>
    %336 = arith.maximumf %334, %335 : vector<2x32xf32>
    %c0_67 = arith.constant 0 : index
    %c0_68 = arith.constant 0 : index
    %337 = vector.load %arg7[%c0_67, %c0_68] : memref<32x1xf32, #tpu.memory_space<vmem>>, vector<32x1xf32>
    %cst_69 = arith.constant dense<0.000000e+00> : vector<2x1xf32>
    %338 = tpu.matmul %336, %337, %cst_69 {dimension_numbers = #tpu.dot_dimension_numbers<[1], [0], [0], [1], [0, 0, 1, 1], [], []>} : vector<2x32xf32>, vector<32x1xf32>, vector<2x1xf32> -> vector<2x1xf32>
    %c0_70 = arith.constant 0 : index
    %c0_71 = arith.constant 0 : index
    %339 = vector.load %arg8[%c0_70, %c0_71] : memref<1x1xf32, #tpu.memory_space<vmem>>, vector<1x1xf32>
    %340 = vector.broadcast %339 : vector<1x1xf32> to vector<2x1xf32>
    %341 = arith.addf %338, %340 : vector<2x1xf32>
    %c0_72 = arith.constant 0 : index
    %c0_73 = arith.constant 0 : index
    %342 = vector.load %arg9[%c0_72, %c0_73] : memref<2x1xf32, #tpu.memory_space<vmem>>, vector<2x1xf32>
    tpu.vector_store %arg9[%c0_72, %c0_73], %341 {strides = array<i32>} : memref<2x1xf32, #tpu.memory_space<vmem>>, vector<2x1xf32>,
    return
  }
}

</mosaic_0001>

<llo_original>
// kernel: lstm_base_forward.1
$region0: #{lstm_base_forward.1}
  #allocation0 [shape = 'u32[]', space=smem, size = 0x4, offset = 0x4, fixed_abs, tag = 'smem constant byte address 0x4 - core index']
  #allocation1 [shape = 'u32[72,128]{1,0:T(1,128)}', space=vmem, size = 0x9000, scoped, tag = 'internal scratch']
  #allocation2 [shape = 'f32[2,512]{1,0:T(2,128)}', space=vmem, size = 0x1000, scoped, tag = 'scratch operand']
  #allocation3 [shape = 'f32[1,1]{1,0:T(1,128)S(1)}', space=vmem, size = 0x200, scoped, tag = 'scoped memory for lstm_base_forward.1']
  %s0 = inlined_call_operand.vmem [shape: f32[16,16], index: 0, kind: input, shape index: {}]
  %s1 = inlined_call_operand.vmem [shape: f32[16,256], index: 1, kind: input, shape index: {}]
  %s2 = inlined_call_operand.vmem [shape: f32[1,256], index: 2, kind: input, shape index: {}]
  %s3 = inlined_call_operand.vmem [shape: f32[32,128], index: 3, kind: input, shape index: {}]
  %s4 = inlined_call_operand.vmem [shape: f32[32,128], index: 4, kind: input, shape index: {}]
  %s5 = inlined_call_operand.vmem [shape: f32[512,32], index: 5, kind: input, shape index: {}]
  %s6 = inlined_call_operand.vmem [shape: f32[1,32], index: 6, kind: input, shape index: {}]
  %s7 = inlined_call_operand.vmem [shape: f32[32,1], index: 7, kind: input, shape index: {}]
  %s8 = inlined_call_operand.<no memory space> [shape: f32[1,1], index: 8, kind: input, shape index: {}]
  %s9 = inlined_call_operand.vmem [shape: f32[2,1], index: 9, kind: output, shape index: {}]
  %s10 = sld [smem:[#allocation0]]
  $region46: #{lstm_base_forward.1} parent=0
    _
  %s12 = ssub.s32 1, %s10
  %s13 = scalar_select 0, %s12, %s10
  %v14 = vstv %s8
  %15 = vst [vmem:[#allocation3] sm:$0x1] %v14
  // Predicated region
  $region2: #{lstm_base_forward.1} parent=0 // pred_check
    _
  $region3: #{lstm_base_forward.1} parent=0 // pred_check_branch
    %17 = sbr.rel (0) target = $region5
  $region4: #{lstm_base_forward.1} parent=0 // pred_region
    _
  $region5: #{lstm_base_forward.1} parent=0 // pred_fallthru
    _
  // Predicated region
  $region6: #{lstm_base_forward.1} parent=0 // pred_check
    _
  $region7: #{lstm_base_forward.1} parent=0 // pred_check_branch
    %19 = sbr.rel (0) target = $region9
  $region8: #{lstm_base_forward.1} parent=0 // pred_region
    _
  $region9: #{lstm_base_forward.1} parent=0 // pred_fallthru
    _
  // Predicated region
  $region10: #{lstm_base_forward.1} parent=0 // pred_check
    _
  $region11: #{lstm_base_forward.1} parent=0 // pred_check_branch
    %21 = sbr.rel (0) target = $region13
  $region12: #{lstm_base_forward.1} parent=0 // pred_region
    _
  $region13: #{lstm_base_forward.1} parent=0 // pred_fallthru
    _
  // Predicated region
  $region14: #{lstm_base_forward.1} parent=0 // pred_check
    _
  $region15: #{lstm_base_forward.1} parent=0 // pred_check_branch
    %23 = sbr.rel (0) target = $region17
  $region16: #{lstm_base_forward.1} parent=0 // pred_region
    _
  $region17: #{lstm_base_forward.1} parent=0 // pred_fallthru
    _
  // Predicated region
  $region18: #{lstm_base_forward.1} parent=0 // pred_check
    _
  $region19: #{lstm_base_forward.1} parent=0 // pred_check_branch
    %25 = sbr.rel (0) target = $region21
  $region20: #{lstm_base_forward.1} parent=0 // pred_region
    _
  $region21: #{lstm_base_forward.1} parent=0 // pred_fallthru
    _
  // Predicated region
  $region22: #{lstm_base_forward.1} parent=0 // pred_check
    _
  $region23: #{lstm_base_forward.1} parent=0 // pred_check_branch
    %27 = sbr.rel (0) target = $region25
  $region24: #{lstm_base_forward.1} parent=0 // pred_region
    _
  $region25: #{lstm_base_forward.1} parent=0 // pred_fallthru
    _
  // Predicated region
  $region26: #{lstm_base_forward.1} parent=0 // pred_check
    _
  $region27: #{lstm_base_forward.1} parent=0 // pred_check_branch
    %29 = sbr.rel (0) target = $region29
  $region28: #{lstm_base_forward.1} parent=0 // pred_region
    _
  $region29: #{lstm_base_forward.1} parent=0 // pred_fallthru
    _
  // Predicated region
  $region30: #{lstm_base_forward.1} parent=0 // pred_check
    _
  $region31: #{lstm_base_forward.1} parent=0 // pred_check_branch
    %31 = sbr.rel (0) target = $region33
  $region32: #{lstm_base_forward.1} parent=0 // pred_region
    _
  $region33: #{lstm_base_forward.1} parent=0 // pred_fallthru
    _
  // Predicated region
  $region34: #{lstm_base_forward.1} parent=0 // pred_check
    _
  $region35: #{lstm_base_forward.1} parent=0 // pred_check_branch
    %33 = sbr.rel (0) target = $region37
  $region36: #{lstm_base_forward.1} parent=0 // pred_region
    _
  $region37: #{lstm_base_forward.1} parent=0 // pred_fallthru
    _
  %v34 = vld [vmem:[%s0] sm:$0xff]
  %v35 = vld [vmem:[%s0 + $0x8] sm:$0xff]
  %v36 = vld [vmem:[%s1] sm:$0xff]
  %v37 = vld [vmem:[%s1 + $0x8] sm:$0xff]
  %v38 = vld [vmem:[%s1 + $0x10] sm:$0xff]
  %v39 = vld [vmem:[%s1 + $0x18] sm:$0xff]
  %v40 = vld [vmem:[%s2] sm:$0x3]
  %v42 = vperm.slane %v40, 0
  %v43 = vperm.slane %v40, 1
  %vm46 = vcmask 130048
  %v48 = vsel %vm46, %v34, 0
  %v51 = vsel %vm46, %v35, 0
  %53 = vmatpush.msra.mxu0 0.0
  %54 = vmatpush.msra.mxu0 0.0
  %55 = vmatpush.msra.mxu0 0.0
  %56 = vmatpush.msra.mxu0 0.0
  %57 = vmatpush.msra.mxu0 0.0
  %58 = vmatpush.msra.mxu0 0.0
  %59 = vmatpush.msra.mxu0 0.0
  %60 = vmatpush.msra.mxu0 0.0
  %61 = vmatpush.msra.mxu0 0.0
  %62 = vmatpush.msra.mxu0 0.0
  %63 = vmatpush.msra.mxu0 0.0
  %64 = vmatpush.msra.mxu0 0.0
  %65 = vmatpush.msra.mxu0 0.0
  %66 = vmatpush.msra.mxu0 0.0
  %67 = vmatpush.msra.mxu0 %v38
  %68 = vmatpush.msra.mxu0 %v36
  %69 = vmatmul.f32.gmra.mxu0 %v48
  %v70 = vpop.f32.mrf.mxu0
  %v71 = vadd.f32 %v42, %v70
  %72 = vmatmul.f32.gmra.mxu0 %v51
  %v73 = vpop.f32.mrf.mxu0
  %v74 = vadd.f32 %v42, %v73
  %75 = vdwg.mxu0
  %76 = vmatpush.msra.mxu0 0.0
  %77 = vmatpush.msra.mxu0 0.0
  %78 = vmatpush.msra.mxu0 0.0
  %79 = vmatpush.msra.mxu0 0.0
  %80 = vmatpush.msra.mxu0 0.0
  %81 = vmatpush.msra.mxu0 0.0
  %82 = vmatpush.msra.mxu0 0.0
  %83 = vmatpush.msra.mxu0 0.0
  %84 = vmatpush.msra.mxu0 0.0
  %85 = vmatpush.msra.mxu0 0.0
  %86 = vmatpush.msra.mxu0 0.0
  %87 = vmatpush.msra.mxu0 0.0
  %88 = vmatpush.msra.mxu0 0.0
  %89 = vmatpush.msra.mxu0 0.0
  %90 = vmatpush.msra.mxu0 %v39
  %91 = vmatpush.msra.mxu0 %v37
  %92 = vmatmul.f32.gmra.mxu0 %v48
  %v93 = vpop.f32.mrf.mxu0
  %v94 = vadd.f32 %v43, %v93
  %95 = vmatmul.f32.gmra.mxu0 %v51
  %v96 = vpop.f32.mrf.mxu0
  %v97 = vadd.f32 %v43, %v96
  %98 = vdwg.mxu0
  %v99 = vld [vmem:[%s3] sm:$0xff]
  %v100 = vld [vmem:[%s3 + $0x8] sm:$0xff]
  %v101 = vld [vmem:[%s3 + $0x10] sm:$0xff]
  %v102 = vld [vmem:[%s3 + $0x18] sm:$0xff]
  %v103 = vld [vmem:[%s4] sm:$0xff]
  %v104 = vld [vmem:[%s4 + $0x8] sm:$0xff]
  %v105 = vld [vmem:[%s4 + $0x10] sm:$0xff]
  %v106 = vld [vmem:[%s4 + $0x18] sm:$0xff]
  %vm107 = vcmask 261120
  %v109 = vsel %vm107, 0.0, 0
  %111 = vmatpush.msra.mxu0 0.0
  %112 = vmatpush.msra.mxu0 0.0
  %113 = vmatpush.msra.mxu0 0.0
  %114 = vmatpush.msra.mxu0 0.0
  %115 = vmatpush.msra.mxu0 0.0
  %116 = vmatpush.msra.mxu0 0.0
  %117 = vmatpush.msra.mxu0 0.0
  %118 = vmatpush.msra.mxu0 0.0
  %119 = vmatpush.msra.mxu0 0.0
  %120 = vmatpush.msra.mxu0 0.0
  %121 = vmatpush.msra.mxu0 0.0
  %122 = vmatpush.msra.mxu0 0.0
  %123 = vmatpush.msra.mxu0 %v102
  %124 = vmatpush.msra.mxu0 %v101
  %125 = vmatpush.msra.mxu0 %v100
  %126 = vmatpush.msra.mxu0 %v99
  %127 = vmatmul.f32.gmra.mxu0 %v109
  %v128 = vpop.f32.mrf.mxu0
  %v129 = vadd.f32 0.0, %v128
  %130 = vdwg.mxu0
  %v131 = vadd.f32 %v71, %v129
  %132 = vmatpush.msra.mxu0 0.0
  %133 = vmatpush.msra.mxu0 0.0
  %134 = vmatpush.msra.mxu0 0.0
  %135 = vmatpush.msra.mxu0 0.0
  %136 = vmatpush.msra.mxu0 0.0
  %137 = vmatpush.msra.mxu0 0.0
  %138 = vmatpush.msra.mxu0 0.0
  %139 = vmatpush.msra.mxu0 0.0
  %140 = vmatpush.msra.mxu0 0.0
  %141 = vmatpush.msra.mxu0 0.0
  %142 = vmatpush.msra.mxu0 0.0
  %143 = vmatpush.msra.mxu0 0.0
  %144 = vmatpush.msra.mxu0 %v106
  %145 = vmatpush.msra.mxu0 %v105
  %146 = vmatpush.msra.mxu0 %v104
  %147 = vmatpush.msra.mxu0 %v103
  %148 = vmatmul.f32.gmra.mxu0 %v109
  %v149 = vpop.f32.mrf.mxu0
  %v150 = vadd.f32 0.0, %v149
  %151 = vdwg.mxu0
  %v153 = vrot.slane %v150, 2
  %v155 = vadd.f32 %v97, %v153
  %v156 = vxor.u32 %v131, 2147483648
  %v157 = vmul.f32 %v156, 1.442695
  %v158 = vpow.pop %v157
  %v159 = vadd.f32 %v158, 1.0
  %v160 = vrcp.pop %v159
  %v161 = vmul.f32 %v159, %v160
  %v162 = vsub.f32 1.0, %v161
  %v163 = vmul.f32 %v160, %v162
  %v164 = vadd.f32 %v160, %v163
  %vm165 = vweird.f32 %v159
  %vm166 = vweird.f32 %v160
  %vm167 = vmor %vm165, %vm166
  %v168 = vsel %vm167, %v160, %v164
  %v169 = vand.u32 2147483647, %v159
  %vm170 = vcmp.eq.f32.partialorder %v169, 8.507059e+37
  %v171 = vand.u32 %v159, 2147483648
  %v172 = vor.u32 1.1754944e-38, %v171
  %v173 = vsel %vm170, %v172, %v168
  %v174 = vmul.f32 1.0, %v173
  %v175 = vtanh.pop %v131
  %v176 = vmul.f32 %v174, 0.0
  %178 = vrot.lane.b32.xlu0 %v175, 32
  %v179 = vpop.permute.xlu0 %178
  %v181 = vmul.f32 %v174, %v179
  %183 = vrot.lane.b32.xlu0 %v181, 32
  %v184 = vpop.permute.xlu0 %183
  %v186 = vadd.f32 %v176, %v184
  %v187 = vtanh.pop %v186
  %189 = vrot.lane.b32.xlu0 %v187, 32
  %v190 = vpop.permute.xlu0 %189
  %v192 = vmul.f32 %v174, %v190
  %v193 = vxor.u32 %v155, 2147483648
  %v194 = vmul.f32 %v193, 1.442695
  %v195 = vpow.pop %v194
  %v196 = vadd.f32 %v195, 1.0
  %v197 = vrcp.pop %v196
  %v198 = vmul.f32 %v196, %v197
  %v199 = vsub.f32 1.0, %v198
  %v200 = vmul.f32 %v197, %v199
  %v201 = vadd.f32 %v197, %v200
  %vm202 = vweird.f32 %v196
  %vm203 = vweird.f32 %v197
  %vm204 = vmor %vm202, %vm203
  %v205 = vsel %vm204, %v197, %v201
  %v206 = vand.u32 2147483647, %v196
  %vm207 = vcmp.eq.f32.partialorder %v206, 8.507059e+37
  %v208 = vand.u32 %v196, 2147483648
  %v209 = vor.u32 1.1754944e-38, %v208
  %v210 = vsel %vm207, %v209, %v205
  %v211 = vmul.f32 1.0, %v210
  %v212 = vtanh.pop %v155
  %v213 = vmul.f32 %v211, 0.0
  %215 = vrot.lane.b32.xlu0 %v212, 32
  %v216 = vpop.permute.xlu0 %215
  %v218 = vmul.f32 %v211, %v216
  %220 = vrot.lane.b32.xlu0 %v218, 32
  %v221 = vpop.permute.xlu0 %220
  %v223 = vadd.f32 %v213, %v221
  %v224 = vtanh.pop %v223
  %226 = vrot.lane.b32.xlu0 %v224, 32
  %v227 = vpop.permute.xlu0 %226
  %v229 = vmul.f32 %v211, %v227
  %231 = vrot.lane.b32.xlu0 %v192, 64
  %v232 = vpop.permute.xlu0 %231
  %vm234 = vcmask 254976
  %235 = vst.msk [vmem:[#allocation2] sm:$0x3] %vm234, %v232
  %237 = vst.sshfl [vmem:[#allocation1] sm:$0xff pattern:$0x73625140] %v229
  %s238 = scalar_lea.vmem [#allocation1], 3
  %v239 = vld [vmem:[%s238] ss:$4 sm:$0xff]
  %240 = vrot.lane.b32.xlu0 %v239, 32
  %v241 = vpop.permute.xlu0 %240
  %vm243 = vcmask 1042176
  %244 = vst.msk [vmem:[#allocation2 + $0x6] sm:$0x3] %vm243, %v241
  %v245 = vsel %vm107, %v232, 0
  %247 = vmatpush.msra.mxu0 0.0
  %248 = vmatpush.msra.mxu0 0.0
  %249 = vmatpush.msra.mxu0 0.0
  %250 = vmatpush.msra.mxu0 0.0
  %251 = vmatpush.msra.mxu0 0.0
  %252 = vmatpush.msra.mxu0 0.0
  %253 = vmatpush.msra.mxu0 0.0
  %254 = vmatpush.msra.mxu0 0.0
  %255 = vmatpush.msra.mxu0 0.0
  %256 = vmatpush.msra.mxu0 0.0
  %257 = vmatpush.msra.mxu0 0.0
  %258 = vmatpush.msra.mxu0 0.0
  %259 = vmatpush.msra.mxu0 %v102
  %260 = vmatpush.msra.mxu0 %v101
  %261 = vmatpush.msra.mxu0 %v100
  %262 = vmatpush.msra.mxu0 %v99
  %263 = vmatmul.f32.gmra.mxu0 %v245
  %v264 = vpop.f32.mrf.mxu0
  %v265 = vadd.f32 0.0, %v264
  %266 = vdwg.mxu0
  %v268 = vrot.slane %v265, 6
  %v270 = vadd.f32 %v71, %v268
  %v271 = vrot.slane %v229, 6
  %272 = vrot.lane.b32.xlu0 %v271, 64
  %v273 = vpop.permute.xlu0 %272
  %v274 = vsel %vm107, %v273, 0
  %276 = vmatpush.msra.mxu0 0.0
  %277 = vmatpush.msra.mxu0 0.0
  %278 = vmatpush.msra.mxu0 0.0
  %279 = vmatpush.msra.mxu0 0.0
  %280 = vmatpush.msra.mxu0 0.0
  %281 = vmatpush.msra.mxu0 0.0
  %282 = vmatpush.msra.mxu0 0.0
  %283 = vmatpush.msra.mxu0 0.0
  %284 = vmatpush.msra.mxu0 0.0
  %285 = vmatpush.msra.mxu0 0.0
  %286 = vmatpush.msra.mxu0 0.0
  %287 = vmatpush.msra.mxu0 0.0
  %288 = vmatpush.msra.mxu0 %v106
  %289 = vmatpush.msra.mxu0 %v105
  %290 = vmatpush.msra.mxu0 %v104
  %291 = vmatpush.msra.mxu0 %v103
  %292 = vmatmul.f32.gmra.mxu0 %v274
  %v293 = vpop.f32.mrf.mxu0
  %v294 = vadd.f32 0.0, %v293
  %295 = vdwg.mxu0
  %v297 = vrot.slane %v294, 4
  %v299 = vadd.f32 %v97, %v297
  %v300 = vxor.u32 %v270, 2147483648
  %v301 = vmul.f32 %v300, 1.442695
  %v302 = vpow.pop %v301
  %v303 = vadd.f32 %v302, 1.0
  %v304 = vrcp.pop %v303
  %v305 = vmul.f32 %v303, %v304
  %v306 = vsub.f32 1.0, %v305
  %v307 = vmul.f32 %v304, %v306
  %v308 = vadd.f32 %v304, %v307
  %vm309 = vweird.f32 %v303
  %vm310 = vweird.f32 %v304
  %vm311 = vmor %vm309, %vm310
  %v312 = vsel %vm311, %v304, %v308
  %v313 = vand.u32 2147483647, %v303
  %vm314 = vcmp.eq.f32.partialorder %v313, 8.507059e+37
  %v315 = vand.u32 %v303, 2147483648
  %v316 = vor.u32 1.1754944e-38, %v315
  %v317 = vsel %vm314, %v316, %v312
  %v318 = vmul.f32 1.0, %v317
  %v319 = vtanh.pop %v270
  %v321 = vrot.slane %v186, 6
  %v323 = vmul.f32 %v318, %v321
  %325 = vrot.lane.b32.xlu0 %v319, 32
  %v326 = vpop.permute.xlu0 %325
  %v328 = vmul.f32 %v318, %v326
  %330 = vrot.lane.b32.xlu0 %v328, 32
  %v331 = vpop.permute.xlu0 %330
  %v333 = vadd.f32 %v323, %v331
  %v334 = vtanh.pop %v333
  %336 = vrot.lane.b32.xlu0 %v334, 32
  %v337 = vpop.permute.xlu0 %336
  %v339 = vmul.f32 %v318, %v337
  %v340 = vxor.u32 %v299, 2147483648
  %v341 = vmul.f32 %v340, 1.442695
  %v342 = vpow.pop %v341
  %v343 = vadd.f32 %v342, 1.0
  %v344 = vrcp.pop %v343
  %v345 = vmul.f32 %v343, %v344
  %v346 = vsub.f32 1.0, %v345
  %v347 = vmul.f32 %v344, %v346
  %v348 = vadd.f32 %v344, %v347
  %vm349 = vweird.f32 %v343
  %vm350 = vweird.f32 %v344
  %vm351 = vmor %vm349, %vm350
  %v352 = vsel %vm351, %v344, %v348
  %v353 = vand.u32 2147483647, %v343
  %vm354 = vcmp.eq.f32.partialorder %v353, 8.507059e+37
  %v355 = vand.u32 %v343, 2147483648
  %v356 = vor.u32 1.1754944e-38, %v355
  %v357 = vsel %vm354, %v356, %v352
  %v358 = vmul.f32 1.0, %v357
  %v359 = vtanh.pop %v299
  %v361 = vrot.slane %v223, 2
  %v363 = vmul.f32 %v358, %v361
  %365 = vrot.lane.b32.xlu0 %v359, 32
  %v366 = vpop.permute.xlu0 %365
  %v368 = vmul.f32 %v358, %v366
  %370 = vrot.lane.b32.xlu0 %v368, 32
  %v371 = vpop.permute.xlu0 %370
  %v373 = vadd.f32 %v363, %v371
  %v374 = vtanh.pop %v373
  %376 = vrot.lane.b32.xlu0 %v374, 32
  %v377 = vpop.permute.xlu0 %376
  %v379 = vmul.f32 %v358, %v377
  %381 = vst.sshfl [vmem:[#allocation1] sm:$0xff pattern:$0x73625140] %v339
  %s382 = scalar_lea.vmem [#allocation1], 1
  %v383 = vld [vmem:[%s382] ss:$4 sm:$0xff]
  %vm385 = vcmask 779776
  %386 = vst.msk [vmem:[#allocation2] sm:$0x3] %vm385, %v383
  %388 = vst.sshfl [vmem:[#allocation1] sm:$0xff pattern:$0x73625140] %v379
  %s389 = scalar_lea.vmem [#allocation1], 2
  %v390 = vld [vmem:[%s389] ss:$4 sm:$0xff]
  %391 = vrot.lane.b32.xlu0 %v390, 96
  %v392 = vpop.permute.xlu0 %391
  %vm394 = vcmask 517376
  %395 = vst.msk [vmem:[#allocation2 + $0x6] sm:$0x3] %vm394, %v392
  %v396 = vrot.slane %v339, 2
  %397 = vrot.lane.b32.xlu0 %v396, 64
  %v398 = vpop.permute.xlu0 %397
  %v399 = vsel %vm107, %v398, 0
  %401 = vmatpush.msra.mxu0 0.0
  %402 = vmatpush.msra.mxu0 0.0
  %403 = vmatpush.msra.mxu0 0.0
  %404 = vmatpush.msra.mxu0 0.0
  %405 = vmatpush.msra.mxu0 0.0
  %406 = vmatpush.msra.mxu0 0.0
  %407 = vmatpush.msra.mxu0 0.0
  %408 = vmatpush.msra.mxu0 0.0
  %409 = vmatpush.msra.mxu0 0.0
  %410 = vmatpush.msra.mxu0 0.0
  %411 = vmatpush.msra.mxu0 0.0
  %412 = vmatpush.msra.mxu0 0.0
  %413 = vmatpush.msra.mxu0 %v102
  %414 = vmatpush.msra.mxu0 %v101
  %415 = vmatpush.msra.mxu0 %v100
  %416 = vmatpush.msra.mxu0 %v99
  %417 = vmatmul.f32.gmra.mxu0 %v399
  %v418 = vpop.f32.mrf.mxu0
  %v419 = vadd.f32 0.0, %v418
  %420 = vdwg.mxu0
  %v422 = vrot.slane %v419, 4
  %v424 = vadd.f32 %v71, %v422
  %v425 = vrot.slane %v379, 4
  %426 = vrot.lane.b32.xlu0 %v425, 64
  %v427 = vpop.permute.xlu0 %426
  %v428 = vsel %vm107, %v427, 0
  %430 = vmatpush.msra.mxu0 0.0
  %431 = vmatpush.msra.mxu0 0.0
  %432 = vmatpush.msra.mxu0 0.0
  %433 = vmatpush.msra.mxu0 0.0
  %434 = vmatpush.msra.mxu0 0.0
  %435 = vmatpush.msra.mxu0 0.0
  %436 = vmatpush.msra.mxu0 0.0
  %437 = vmatpush.msra.mxu0 0.0
  %438 = vmatpush.msra.mxu0 0.0
  %439 = vmatpush.msra.mxu0 0.0
  %440 = vmatpush.msra.mxu0 0.0
  %441 = vmatpush.msra.mxu0 0.0
  %442 = vmatpush.msra.mxu0 %v106
  %443 = vmatpush.msra.mxu0 %v105
  %444 = vmatpush.msra.mxu0 %v104
  %445 = vmatpush.msra.mxu0 %v103
  %446 = vmatmul.f32.gmra.mxu0 %v428
  %v447 = vpop.f32.mrf.mxu0
  %v448 = vadd.f32 0.0, %v447
  %449 = vdwg.mxu0
  %v451 = vrot.slane %v448, 6
  %v453 = vadd.f32 %v97, %v451
  %v454 = vxor.u32 %v424, 2147483648
  %v455 = vmul.f32 %v454, 1.442695
  %v456 = vpow.pop %v455
  %v457 = vadd.f32 %v456, 1.0
  %v458 = vrcp.pop %v457
  %v459 = vmul.f32 %v457, %v458
  %v460 = vsub.f32 1.0, %v459
  %v461 = vmul.f32 %v458, %v460
  %v462 = vadd.f32 %v458, %v461
  %vm463 = vweird.f32 %v457
  %vm464 = vweird.f32 %v458
  %vm465 = vmor %vm463, %vm464
  %v466 = vsel %vm465, %v458, %v462
  %v467 = vand.u32 2147483647, %v457
  %vm468 = vcmp.eq.f32.partialorder %v467, 8.507059e+37
  %v469 = vand.u32 %v457, 2147483648
  %v470 = vor.u32 1.1754944e-38, %v469
  %v471 = vsel %vm468, %v470, %v466
  %v472 = vmul.f32 1.0, %v471
  %v473 = vtanh.pop %v424
  %v475 = vrot.slane %v333, 6
  %v477 = vmul.f32 %v472, %v475
  %479 = vrot.lane.b32.xlu0 %v473, 32
  %v480 = vpop.permute.xlu0 %479
  %v482 = vmul.f32 %v472, %v480
  %484 = vrot.lane.b32.xlu0 %v482, 32
  %v485 = vpop.permute.xlu0 %484
  %v487 = vadd.f32 %v477, %v485
  %v488 = vtanh.pop %v487
  %490 = vrot.lane.b32.xlu0 %v488, 32
  %v491 = vpop.permute.xlu0 %490
  %v493 = vmul.f32 %v472, %v491
  %v494 = vxor.u32 %v453, 2147483648
  %v495 = vmul.f32 %v494, 1.442695
  %v496 = vpow.pop %v495
  %v497 = vadd.f32 %v496, 1.0
  %v498 = vrcp.pop %v497
  %v499 = vmul.f32 %v497, %v498
  %v500 = vsub.f32 1.0, %v499
  %v501 = vmul.f32 %v498, %v500
  %v502 = vadd.f32 %v498, %v501
  %vm503 = vweird.f32 %v497
  %vm504 = vweird.f32 %v498
  %vm505 = vmor %vm503, %vm504
  %v506 = vsel %vm505, %v498, %v502
  %v507 = vand.u32 2147483647, %v497
  %vm508 = vcmp.eq.f32.partialorder %v507, 8.507059e+37
  %v509 = vand.u32 %v497, 2147483648
  %v510 = vor.u32 1.1754944e-38, %v509
  %v511 = vsel %vm508, %v510, %v506
  %v512 = vmul.f32 1.0, %v511
  %v513 = vtanh.pop %v453
  %v515 = vrot.slane %v373, 2
  %v517 = vmul.f32 %v512, %v515
  %519 = vrot.lane.b32.xlu0 %v513, 32
  %v520 = vpop.permute.xlu0 %519
  %v522 = vmul.f32 %v512, %v520
  %524 = vrot.lane.b32.xlu0 %v522, 32
  %v525 = vpop.permute.xlu0 %524
  %v527 = vadd.f32 %v517, %v525
  %v528 = vtanh.pop %v527
  %530 = vrot.lane.b32.xlu0 %v528, 32
  %v531 = vpop.permute.xlu0 %530
  %v533 = vmul.f32 %v512, %v531
  %535 = vst.sshfl [vmem:[#allocation1] sm:$0xff pattern:$0x73625140] %v493
  %s536 = scalar_lea.vmem [#allocation1], 2
  %v537 = vld [vmem:[%s536] ss:$4 sm:$0xff]
  %538 = vrot.lane.b32.xlu0 %v537, 64
  %v539 = vpop.permute.xlu0 %538
  %541 = vst.msk [vmem:[#allocation2 + $0x2] sm:$0x3] %vm234, %v539
  %543 = vst.sshfl [vmem:[#allocation1] sm:$0xff pattern:$0x73625140] %v533
  %s544 = scalar_lea.vmem [#allocation1], 1
  %v545 = vld [vmem:[%s544] ss:$4 sm:$0xff]
  %546 = vrot.lane.b32.xlu0 %v545, 32
  %v547 = vpop.permute.xlu0 %546
  %549 = vst.msk [vmem:[#allocation2 + $0x4] sm:$0x3] %vm243, %v547
  %v550 = vrot.slane %v493, 4
  %551 = vrot.lane.b32.xlu0 %v550, 64
  %v552 = vpop.permute.xlu0 %551
  %v553 = vsel %vm107, %v552, 0
  %555 = vmatpush.msra.mxu0 0.0
  %556 = vmatpush.msra.mxu0 0.0
  %557 = vmatpush.msra.mxu0 0.0
  %558 = vmatpush.msra.mxu0 0.0
  %559 = vmatpush.msra.mxu0 0.0
  %560 = vmatpush.msra.mxu0 0.0
  %561 = vmatpush.msra.mxu0 0.0
  %562 = vmatpush.msra.mxu0 0.0
  %563 = vmatpush.msra.mxu0 0.0
  %564 = vmatpush.msra.mxu0 0.0
  %565 = vmatpush.msra.mxu0 0.0
  %566 = vmatpush.msra.mxu0 0.0
  %567 = vmatpush.msra.mxu0 %v102
  %568 = vmatpush.msra.mxu0 %v101
  %569 = vmatpush.msra.mxu0 %v100
  %570 = vmatpush.msra.mxu0 %v99
  %571 = vmatmul.f32.gmra.mxu0 %v553
  %v572 = vpop.f32.mrf.mxu0
  %v573 = vadd.f32 0.0, %v572
  %574 = vdwg.mxu0
  %v576 = vrot.slane %v573, 2
  %v578 = vadd.f32 %v71, %v576
  %v579 = vrot.slane %v533, 2
  %580 = vrot.lane.b32.xlu0 %v579, 64
  %v581 = vpop.permute.xlu0 %580
  %v582 = vsel %vm107, %v581, 0
  %584 = vmatpush.msra.mxu0 0.0
  %585 = vmatpush.msra.mxu0 0.0
  %586 = vmatpush.msra.mxu0 0.0
  %587 = vmatpush.msra.mxu0 0.0
  %588 = vmatpush.msra.mxu0 0.0
  %589 = vmatpush.msra.mxu0 0.0
  %590 = vmatpush.msra.mxu0 0.0
  %591 = vmatpush.msra.mxu0 0.0
  %592 = vmatpush.msra.mxu0 0.0
  %593 = vmatpush.msra.mxu0 0.0
  %594 = vmatpush.msra.mxu0 0.0
  %595 = vmatpush.msra.mxu0 0.0
  %596 = vmatpush.msra.mxu0 %v106
  %597 = vmatpush.msra.mxu0 %v105
  %598 = vmatpush.msra.mxu0 %v104
  %599 = vmatpush.msra.mxu0 %v103
  %600 = vmatmul.f32.gmra.mxu0 %v582
  %v601 = vpop.f32.mrf.mxu0
  %v602 = vadd.f32 0.0, %v601
  %603 = vdwg.mxu0
  %v604 = vadd.f32 %v97, %v602
  %v605 = vxor.u32 %v578, 2147483648
  %v606 = vmul.f32 %v605, 1.442695
  %v607 = vpow.pop %v606
  %v608 = vadd.f32 %v607, 1.0
  %v609 = vrcp.pop %v608
  %v610 = vmul.f32 %v608, %v609
  %v611 = vsub.f32 1.0, %v610
  %v612 = vmul.f32 %v609, %v611
  %v613 = vadd.f32 %v609, %v612
  %vm614 = vweird.f32 %v608
  %vm615 = vweird.f32 %v609
  %vm616 = vmor %vm614, %vm615
  %v617 = vsel %vm616, %v609, %v613
  %v618 = vand.u32 2147483647, %v608
  %vm619 = vcmp.eq.f32.partialorder %v618, 8.507059e+37
  %v620 = vand.u32 %v608, 2147483648
  %v621 = vor.u32 1.1754944e-38, %v620
  %v622 = vsel %vm619, %v621, %v617
  %v623 = vmul.f32 1.0, %v622
  %v624 = vtanh.pop %v578
  %v626 = vrot.slane %v487, 6
  %v628 = vmul.f32 %v623, %v626
  %630 = vrot.lane.b32.xlu0 %v624, 32
  %v631 = vpop.permute.xlu0 %630
  %v633 = vmul.f32 %v623, %v631
  %635 = vrot.lane.b32.xlu0 %v633, 32
  %v636 = vpop.permute.xlu0 %635
  %v638 = vadd.f32 %v628, %v636
  %v639 = vtanh.pop %v638
  %641 = vrot.lane.b32.xlu0 %v639, 32
  %v642 = vpop.permute.xlu0 %641
  %v644 = vmul.f32 %v623, %v642
  %v645 = vxor.u32 %v604, 2147483648
  %v646 = vmul.f32 %v645, 1.442695
  %v647 = vpow.pop %v646
  %v648 = vadd.f32 %v647, 1.0
  %v649 = vrcp.pop %v648
  %v650 = vmul.f32 %v648, %v649
  %v651 = vsub.f32 1.0, %v650
  %v652 = vmul.f32 %v649, %v651
  %v653 = vadd.f32 %v649, %v652
  %vm654 = vweird.f32 %v648
  %vm655 = vweird.f32 %v649
  %vm656 = vmor %vm654, %vm655
  %v657 = vsel %vm656, %v649, %v653
  %v658 = vand.u32 2147483647, %v648
  %vm659 = vcmp.eq.f32.partialorder %v658, 8.507059e+37
  %v660 = vand.u32 %v648, 2147483648
  %v661 = vor.u32 1.1754944e-38, %v660
  %v662 = vsel %vm659, %v661, %v657
  %v663 = vmul.f32 1.0, %v662
  %v664 = vtanh.pop %v604
  %v666 = vrot.slane %v527, 2
  %v668 = vmul.f32 %v663, %v666
  %670 = vrot.lane.b32.xlu0 %v664, 32
  %v671 = vpop.permute.xlu0 %670
  %v673 = vmul.f32 %v663, %v671
  %675 = vrot.lane.b32.xlu0 %v673, 32
  %v676 = vpop.permute.xlu0 %675
  %v678 = vadd.f32 %v668, %v676
  %v679 = vtanh.pop %v678
  %681 = vrot.lane.b32.xlu0 %v679, 32
  %v682 = vpop.permute.xlu0 %681
  %v684 = vmul.f32 %v663, %v682
  %686 = vst.sshfl [vmem:[#allocation1] sm:$0xff pattern:$0x73625140] %v644
  %s687 = scalar_lea.vmem [#allocation1], 3
  %v688 = vld [vmem:[%s687] ss:$4 sm:$0xff]
  %690 = vst.msk [vmem:[#allocation2 + $0x2] sm:$0x3] %vm385, %v688
  %692 = vrot.lane.b32.xlu0 %v684, 96
  %v693 = vpop.permute.xlu0 %692
  %695 = vst.msk [vmem:[#allocation2 + $0x4] sm:$0x3] %vm394, %v693
  %v696 = vrot.slane %v644, 6
  %697 = vrot.lane.b32.xlu0 %v696, 64
  %v698 = vpop.permute.xlu0 %697
  %v699 = vsel %vm107, %v698, 0
  %701 = vmatpush.msra.mxu0 0.0
  %702 = vmatpush.msra.mxu0 0.0
  %703 = vmatpush.msra.mxu0 0.0
  %704 = vmatpush.msra.mxu0 0.0
  %705 = vmatpush.msra.mxu0 0.0
  %706 = vmatpush.msra.mxu0 0.0
  %707 = vmatpush.msra.mxu0 0.0
  %708 = vmatpush.msra.mxu0 0.0
  %709 = vmatpush.msra.mxu0 0.0
  %710 = vmatpush.msra.mxu0 0.0
  %711 = vmatpush.msra.mxu0 0.0
  %712 = vmatpush.msra.mxu0 0.0
  %713 = vmatpush.msra.mxu0 %v102
  %714 = vmatpush.msra.mxu0 %v101
  %715 = vmatpush.msra.mxu0 %v100
  %716 = vmatpush.msra.mxu0 %v99
  %717 = vmatmul.f32.gmra.mxu0 %v699
  %v718 = vpop.f32.mrf.mxu0
  %v719 = vadd.f32 0.0, %v718
  %720 = vdwg.mxu0
  %v721 = vadd.f32 %v74, %v719
  %722 = vrot.lane.b32.xlu0 %v684, 64
  %v723 = vpop.permute.xlu0 %722
  %v724 = vsel %vm107, %v723, 0
  %726 = vmatpush.msra.mxu0 0.0
  %727 = vmatpush.msra.mxu0 0.0
  %728 = vmatpush.msra.mxu0 0.0
  %729 = vmatpush.msra.mxu0 0.0
  %730 = vmatpush.msra.mxu0 0.0
  %731 = vmatpush.msra.mxu0 0.0
  %732 = vmatpush.msra.mxu0 0.0
  %733 = vmatpush.msra.mxu0 0.0
  %734 = vmatpush.msra.mxu0 0.0
  %735 = vmatpush.msra.mxu0 0.0
  %736 = vmatpush.msra.mxu0 0.0
  %737 = vmatpush.msra.mxu0 0.0
  %738 = vmatpush.msra.mxu0 %v106
  %739 = vmatpush.msra.mxu0 %v105
  %740 = vmatpush.msra.mxu0 %v104
  %741 = vmatpush.msra.mxu0 %v103
  %742 = vmatmul.f32.gmra.mxu0 %v724
  %v743 = vpop.f32.mrf.mxu0
  %v744 = vadd.f32 0.0, %v743
  %745 = vdwg.mxu0
  %v747 = vrot.slane %v744, 2
  %v749 = vadd.f32 %v94, %v747
  %v750 = vxor.u32 %v721, 2147483648
  %v751 = vmul.f32 %v750, 1.442695
  %v752 = vpow.pop %v751
  %v753 = vadd.f32 %v752, 1.0
  %v754 = vrcp.pop %v753
  %v755 = vmul.f32 %v753, %v754
  %v756 = vsub.f32 1.0, %v755
  %v757 = vmul.f32 %v754, %v756
  %v758 = vadd.f32 %v754, %v757
  %vm759 = vweird.f32 %v753
  %vm760 = vweird.f32 %v754
  %vm761 = vmor %vm759, %vm760
  %v762 = vsel %vm761, %v754, %v758
  %v763 = vand.u32 2147483647, %v753
  %vm764 = vcmp.eq.f32.partialorder %v763, 8.507059e+37
  %v765 = vand.u32 %v753, 2147483648
  %v766 = vor.u32 1.1754944e-38, %v765
  %v767 = vsel %vm764, %v766, %v762
  %v768 = vmul.f32 1.0, %v767
  %v769 = vtanh.pop %v721
  %v771 = vrot.slane %v638, 6
  %v773 = vmul.f32 %v768, %v771
  %775 = vrot.lane.b32.xlu0 %v769, 32
  %v776 = vpop.permute.xlu0 %775
  %v778 = vmul.f32 %v768, %v776
  %780 = vrot.lane.b32.xlu0 %v778, 32
  %v781 = vpop.permute.xlu0 %780
  %v783 = vadd.f32 %v773, %v781
  %v784 = vtanh.pop %v783
  %786 = vrot.lane.b32.xlu0 %v784, 32
  %v787 = vpop.permute.xlu0 %786
  %v789 = vmul.f32 %v768, %v787
  %v790 = vxor.u32 %v749, 2147483648
  %v791 = vmul.f32 %v790, 1.442695
  %v792 = vpow.pop %v791
  %v793 = vadd.f32 %v792, 1.0
  %v794 = vrcp.pop %v793
  %v795 = vmul.f32 %v793, %v794
  %v796 = vsub.f32 1.0, %v795
  %v797 = vmul.f32 %v794, %v796
  %v798 = vadd.f32 %v794, %v797
  %vm799 = vweird.f32 %v793
  %vm800 = vweird.f32 %v794
  %vm801 = vmor %vm799, %vm800
  %v802 = vsel %vm801, %v794, %v798
  %v803 = vand.u32 2147483647, %v793
  %vm804 = vcmp.eq.f32.partialorder %v803, 8.507059e+37
  %v805 = vand.u32 %v793, 2147483648
  %v806 = vor.u32 1.1754944e-38, %v805
  %v807 = vsel %vm804, %v806, %v802
  %v808 = vmul.f32 1.0, %v807
  %v809 = vtanh.pop %v749
  %v811 = vrot.slane %v678, 2
  %v813 = vmul.f32 %v808, %v811
  %815 = vrot.lane.b32.xlu0 %v809, 32
  %v816 = vpop.permute.xlu0 %815
  %v818 = vmul.f32 %v808, %v816
  %820 = vrot.lane.b32.xlu0 %v818, 32
  %v821 = vpop.permute.xlu0 %820
  %v823 = vadd.f32 %v813, %v821
  %v824 = vtanh.pop %v823
  %826 = vrot.lane.b32.xlu0 %v824, 32
  %v827 = vpop.permute.xlu0 %826
  %v829 = vmul.f32 %v808, %v827
  %831 = vrot.lane.b32.xlu0 %v789, 64
  %v832 = vpop.permute.xlu0 %831
  %834 = vst.msk [vmem:[#allocation2 + $0x4] sm:$0x3] %vm234, %v832
  %836 = vst.sshfl [vmem:[#allocation1] sm:$0xff pattern:$0x73625140] %v829
  %s837 = scalar_lea.vmem [#allocation1], 3
  %v838 = vld [vmem:[%s837] ss:$4 sm:$0xff]
  %839 = vrot.lane.b32.xlu0 %v838, 32
  %v840 = vpop.permute.xlu0 %839
  %842 = vst.msk [vmem:[#allocation2 + $0x2] sm:$0x3] %vm243, %v840
  %v843 = vsel %vm107, %v832, 0
  %845 = vmatpush.msra.mxu0 0.0
  %846 = vmatpush.msra.mxu0 0.0
  %847 = vmatpush.msra.mxu0 0.0
  %848 = vmatpush.msra.mxu0 0.0
  %849 = vmatpush.msra.mxu0 0.0
  %850 = vmatpush.msra.mxu0 0.0
  %851 = vmatpush.msra.mxu0 0.0
  %852 = vmatpush.msra.mxu0 0.0
  %853 = vmatpush.msra.mxu0 0.0
  %854 = vmatpush.msra.mxu0 0.0
  %855 = vmatpush.msra.mxu0 0.0
  %856 = vmatpush.msra.mxu0 0.0
  %857 = vmatpush.msra.mxu0 %v102
  %858 = vmatpush.msra.mxu0 %v101
  %859 = vmatpush.msra.mxu0 %v100
  %860 = vmatpush.msra.mxu0 %v99
  %861 = vmatmul.f32.gmra.mxu0 %v843
  %v862 = vpop.f32.mrf.mxu0
  %v863 = vadd.f32 0.0, %v862
  %864 = vdwg.mxu0
  %v866 = vrot.slane %v863, 6
  %v868 = vadd.f32 %v74, %v866
  %v869 = vrot.slane %v829, 6
  %870 = vrot.lane.b32.xlu0 %v869, 64
  %v871 = vpop.permute.xlu0 %870
  %v872 = vsel %vm107, %v871, 0
  %874 = vmatpush.msra.mxu0 0.0
  %875 = vmatpush.msra.mxu0 0.0
  %876 = vmatpush.msra.mxu0 0.0
  %877 = vmatpush.msra.mxu0 0.0
  %878 = vmatpush.msra.mxu0 0.0
  %879 = vmatpush.msra.mxu0 0.0
  %880 = vmatpush.msra.mxu0 0.0
  %881 = vmatpush.msra.mxu0 0.0
  %882 = vmatpush.msra.mxu0 0.0
  %883 = vmatpush.msra.mxu0 0.0
  %884 = vmatpush.msra.mxu0 0.0
  %885 = vmatpush.msra.mxu0 0.0
  %886 = vmatpush.msra.mxu0 %v106
  %887 = vmatpush.msra.mxu0 %v105
  %888 = vmatpush.msra.mxu0 %v104
  %889 = vmatpush.msra.mxu0 %v103
  %890 = vmatmul.f32.gmra.mxu0 %v872
  %v891 = vpop.f32.mrf.mxu0
  %v892 = vadd.f32 0.0, %v891
  %893 = vdwg.mxu0
  %v895 = vrot.slane %v892, 4
  %v897 = vadd.f32 %v94, %v895
  %v898 = vxor.u32 %v868, 2147483648
  %v899 = vmul.f32 %v898, 1.442695
  %v900 = vpow.pop %v899
  %v901 = vadd.f32 %v900, 1.0
  %v902 = vrcp.pop %v901
  %v903 = vmul.f32 %v901, %v902
  %v904 = vsub.f32 1.0, %v903
  %v905 = vmul.f32 %v902, %v904
  %v906 = vadd.f32 %v902, %v905
  %vm907 = vweird.f32 %v901
  %vm908 = vweird.f32 %v902
  %vm909 = vmor %vm907, %vm908
  %v910 = vsel %vm909, %v902, %v906
  %v911 = vand.u32 2147483647, %v901
  %vm912 = vcmp.eq.f32.partialorder %v911, 8.507059e+37
  %v913 = vand.u32 %v901, 2147483648
  %v914 = vor.u32 1.1754944e-38, %v913
  %v915 = vsel %vm912, %v914, %v910
  %v916 = vmul.f32 1.0, %v915
  %v917 = vtanh.pop %v868
  %v919 = vrot.slane %v783, 6
  %v921 = vmul.f32 %v916, %v919
  %923 = vrot.lane.b32.xlu0 %v917, 32
  %v924 = vpop.permute.xlu0 %923
  %v926 = vmul.f32 %v916, %v924
  %928 = vrot.lane.b32.xlu0 %v926, 32
  %v929 = vpop.permute.xlu0 %928
  %v931 = vadd.f32 %v921, %v929
  %v932 = vtanh.pop %v931
  %934 = vrot.lane.b32.xlu0 %v932, 32
  %v935 = vpop.permute.xlu0 %934
  %v937 = vmul.f32 %v916, %v935
  %v938 = vxor.u32 %v897, 2147483648
  %v939 = vmul.f32 %v938, 1.442695
  %v940 = vpow.pop %v939
  %v941 = vadd.f32 %v940, 1.0
  %v942 = vrcp.pop %v941
  %v943 = vmul.f32 %v941, %v942
  %v944 = vsub.f32 1.0, %v943
  %v945 = vmul.f32 %v942, %v944
  %v946 = vadd.f32 %v942, %v945
  %vm947 = vweird.f32 %v941
  %vm948 = vweird.f32 %v942
  %vm949 = vmor %vm947, %vm948
  %v950 = vsel %vm949, %v942, %v946
  %v951 = vand.u32 2147483647, %v941
  %vm952 = vcmp.eq.f32.partialorder %v951, 8.507059e+37
  %v953 = vand.u32 %v941, 2147483648
  %v954 = vor.u32 1.1754944e-38, %v953
  %v955 = vsel %vm952, %v954, %v950
  %v956 = vmul.f32 1.0, %v955
  %v957 = vtanh.pop %v897
  %v959 = vrot.slane %v823, 2
  %v961 = vmul.f32 %v956, %v959
  %963 = vrot.lane.b32.xlu0 %v957, 32
  %v964 = vpop.permute.xlu0 %963
  %v966 = vmul.f32 %v956, %v964
  %968 = vrot.lane.b32.xlu0 %v966, 32
  %v969 = vpop.permute.xlu0 %968
  %v971 = vadd.f32 %v961, %v969
  %v972 = vtanh.pop %v971
  %974 = vrot.lane.b32.xlu0 %v972, 32
  %v975 = vpop.permute.xlu0 %974
  %v977 = vmul.f32 %v956, %v975
  %979 = vst.sshfl [vmem:[#allocation1] sm:$0xff pattern:$0x73625140] %v937
  %s980 = scalar_lea.vmem [#allocation1], 1
  %v981 = vld [vmem:[%s980] ss:$4 sm:$0xff]
  %983 = vst.msk [vmem:[#allocation2 + $0x4] sm:$0x3] %vm385, %v981
  %985 = vst.sshfl [vmem:[#allocation1] sm:$0xff pattern:$0x73625140] %v977
  %s986 = scalar_lea.vmem [#allocation1], 2
  %v987 = vld [vmem:[%s986] ss:$4 sm:$0xff]
  %988 = vrot.lane.b32.xlu0 %v987, 96
  %v989 = vpop.permute.xlu0 %988
  %991 = vst.msk [vmem:[#allocation2 + $0x2] sm:$0x3] %vm394, %v989
  %v992 = vrot.slane %v937, 2
  %993 = vrot.lane.b32.xlu0 %v992, 64
  %v994 = vpop.permute.xlu0 %993
  %v995 = vsel %vm107, %v994, 0
  %997 = vmatpush.msra.mxu0 0.0
  %998 = vmatpush.msra.mxu0 0.0
  %999 = vmatpush.msra.mxu0 0.0
  %1000 = vmatpush.msra.mxu0 0.0
  %1001 = vmatpush.msra.mxu0 0.0
  %1002 = vmatpush.msra.mxu0 0.0
  %1003 = vmatpush.msra.mxu0 0.0
  %1004 = vmatpush.msra.mxu0 0.0
  %1005 = vmatpush.msra.mxu0 0.0
  %1006 = vmatpush.msra.mxu0 0.0
  %1007 = vmatpush.msra.mxu0 0.0
  %1008 = vmatpush.msra.mxu0 0.0
  %1009 = vmatpush.msra.mxu0 %v102
  %1010 = vmatpush.msra.mxu0 %v101
  %1011 = vmatpush.msra.mxu0 %v100
  %1012 = vmatpush.msra.mxu0 %v99
  %1013 = vmatmul.f32.gmra.mxu0 %v995
  %v1014 = vpop.f32.mrf.mxu0
  %v1015 = vadd.f32 0.0, %v1014
  %1016 = vdwg.mxu0
  %v1018 = vrot.slane %v1015, 4
  %v1020 = vadd.f32 %v74, %v1018
  %v1021 = vrot.slane %v977, 4
  %1022 = vrot.lane.b32.xlu0 %v1021, 64
  %v1023 = vpop.permute.xlu0 %1022
  %v1024 = vsel %vm107, %v1023, 0
  %1026 = vmatpush.msra.mxu0 0.0
  %1027 = vmatpush.msra.mxu0 0.0
  %1028 = vmatpush.msra.mxu0 0.0
  %1029 = vmatpush.msra.mxu0 0.0
  %1030 = vmatpush.msra.mxu0 0.0
  %1031 = vmatpush.msra.mxu0 0.0
  %1032 = vmatpush.msra.mxu0 0.0
  %1033 = vmatpush.msra.mxu0 0.0
  %1034 = vmatpush.msra.mxu0 0.0
  %1035 = vmatpush.msra.mxu0 0.0
  %1036 = vmatpush.msra.mxu0 0.0
  %1037 = vmatpush.msra.mxu0 0.0
  %1038 = vmatpush.msra.mxu0 %v106
  %1039 = vmatpush.msra.mxu0 %v105
  %1040 = vmatpush.msra.mxu0 %v104
  %1041 = vmatpush.msra.mxu0 %v103
  %1042 = vmatmul.f32.gmra.mxu0 %v1024
  %v1043 = vpop.f32.mrf.mxu0
  %v1044 = vadd.f32 0.0, %v1043
  %1045 = vdwg.mxu0
  %v1047 = vrot.slane %v1044, 6
  %v1049 = vadd.f32 %v94, %v1047
  %v1050 = vxor.u32 %v1020, 2147483648
  %v1051 = vmul.f32 %v1050, 1.442695
  %v1052 = vpow.pop %v1051
  %v1053 = vadd.f32 %v1052, 1.0
  %v1054 = vrcp.pop %v1053
  %v1055 = vmul.f32 %v1053, %v1054
  %v1056 = vsub.f32 1.0, %v1055
  %v1057 = vmul.f32 %v1054, %v1056
  %v1058 = vadd.f32 %v1054, %v1057
  %vm1059 = vweird.f32 %v1053
  %vm1060 = vweird.f32 %v1054
  %vm1061 = vmor %vm1059, %vm1060
  %v1062 = vsel %vm1061, %v1054, %v1058
  %v1063 = vand.u32 2147483647, %v1053
  %vm1064 = vcmp.eq.f32.partialorder %v1063, 8.507059e+37
  %v1065 = vand.u32 %v1053, 2147483648
  %v1066 = vor.u32 1.1754944e-38, %v1065
  %v1067 = vsel %vm1064, %v1066, %v1062
  %v1068 = vmul.f32 1.0, %v1067
  %v1069 = vtanh.pop %v1020
  %v1071 = vrot.slane %v931, 6
  %v1073 = vmul.f32 %v1068, %v1071
  %1075 = vrot.lane.b32.xlu0 %v1069, 32
  %v1076 = vpop.permute.xlu0 %1075
  %v1078 = vmul.f32 %v1068, %v1076
  %1080 = vrot.lane.b32.xlu0 %v1078, 32
  %v1081 = vpop.permute.xlu0 %1080
  %v1083 = vadd.f32 %v1073, %v1081
  %v1084 = vtanh.pop %v1083
  %1086 = vrot.lane.b32.xlu0 %v1084, 32
  %v1087 = vpop.permute.xlu0 %1086
  %v1089 = vmul.f32 %v1068, %v1087
  %v1090 = vxor.u32 %v1049, 2147483648
  %v1091 = vmul.f32 %v1090, 1.442695
  %v1092 = vpow.pop %v1091
  %v1093 = vadd.f32 %v1092, 1.0
  %v1094 = vrcp.pop %v1093
  %v1095 = vmul.f32 %v1093, %v1094
  %v1096 = vsub.f32 1.0, %v1095
  %v1097 = vmul.f32 %v1094, %v1096
  %v1098 = vadd.f32 %v1094, %v1097
  %vm1099 = vweird.f32 %v1093
  %vm1100 = vweird.f32 %v1094
  %vm1101 = vmor %vm1099, %vm1100
  %v1102 = vsel %vm1101, %v1094, %v1098
  %v1103 = vand.u32 2147483647, %v1093
  %vm1104 = vcmp.eq.f32.partialorder %v1103, 8.507059e+37
  %v1105 = vand.u32 %v1093, 2147483648
  %v1106 = vor.u32 1.1754944e-38, %v1105
  %v1107 = vsel %vm1104, %v1106, %v1102
  %v1108 = vmul.f32 1.0, %v1107
  %v1109 = vtanh.pop %v1049
  %v1111 = vrot.slane %v971, 2
  %v1113 = vmul.f32 %v1108, %v1111
  %1115 = vrot.lane.b32.xlu0 %v1109, 32
  %v1116 = vpop.permute.xlu0 %1115
  %v1118 = vmul.f32 %v1108, %v1116
  %1120 = vrot.lane.b32.xlu0 %v1118, 32
  %v1121 = vpop.permute.xlu0 %1120
  %v1123 = vadd.f32 %v1113, %v1121
  %v1124 = vtanh.pop %v1123
  %1126 = vrot.lane.b32.xlu0 %v1124, 32
  %v1127 = vpop.permute.xlu0 %1126
  %v1129 = vmul.f32 %v1108, %v1127
  %1131 = vst.sshfl [vmem:[#allocation1] sm:$0xff pattern:$0x73625140] %v1089
  %s1132 = scalar_lea.vmem [#allocation1], 2
  %v1133 = vld [vmem:[%s1132] ss:$4 sm:$0xff]
  %1134 = vrot.lane.b32.xlu0 %v1133, 64
  %v1135 = vpop.permute.xlu0 %1134
  %1137 = vst.msk [vmem:[#allocation2 + $0x6] sm:$0x3] %vm234, %v1135
  %1139 = vst.sshfl [vmem:[#allocation1] sm:$0xff pattern:$0x73625140] %v1129
  %s1140 = scalar_lea.vmem [#allocation1], 1
  %v1141 = vld [vmem:[%s1140] ss:$4 sm:$0xff]
  %1142 = vrot.lane.b32.xlu0 %v1141, 32
  %v1143 = vpop.permute.xlu0 %1142
  %1145 = vst.msk [vmem:[#allocation2] sm:$0x3] %vm243, %v1143
  %v1146 = vrot.slane %v1089, 4
  %1147 = vrot.lane.b32.xlu0 %v1146, 64
  %v1148 = vpop.permute.xlu0 %1147
  %v1149 = vsel %vm107, %v1148, 0
  %1151 = vmatpush.msra.mxu0 0.0
  %1152 = vmatpush.msra.mxu0 0.0
  %1153 = vmatpush.msra.mxu0 0.0
  %1154 = vmatpush.msra.mxu0 0.0
  %1155 = vmatpush.msra.mxu0 0.0
  %1156 = vmatpush.msra.mxu0 0.0
  %1157 = vmatpush.msra.mxu0 0.0
  %1158 = vmatpush.msra.mxu0 0.0
  %1159 = vmatpush.msra.mxu0 0.0
  %1160 = vmatpush.msra.mxu0 0.0
  %1161 = vmatpush.msra.mxu0 0.0
  %1162 = vmatpush.msra.mxu0 0.0
  %1163 = vmatpush.msra.mxu0 %v102
  %1164 = vmatpush.msra.mxu0 %v101
  %1165 = vmatpush.msra.mxu0 %v100
  %1166 = vmatpush.msra.mxu0 %v99
  %1167 = vmatmul.f32.gmra.mxu0 %v1149
  %v1168 = vpop.f32.mrf.mxu0
  %v1169 = vadd.f32 0.0, %v1168
  %1170 = vdwg.mxu0
  %v1172 = vrot.slane %v1169, 2
  %v1174 = vadd.f32 %v74, %v1172
  %v1175 = vrot.slane %v1129, 2
  %1176 = vrot.lane.b32.xlu0 %v1175, 64
  %v1177 = vpop.permute.xlu0 %1176
  %v1178 = vsel %vm107, %v1177, 0
  %1180 = vmatpush.msra.mxu0 0.0
  %1181 = vmatpush.msra.mxu0 0.0
  %1182 = vmatpush.msra.mxu0 0.0
  %1183 = vmatpush.msra.mxu0 0.0
  %1184 = vmatpush.msra.mxu0 0.0
  %1185 = vmatpush.msra.mxu0 0.0
  %1186 = vmatpush.msra.mxu0 0.0
  %1187 = vmatpush.msra.mxu0 0.0
  %1188 = vmatpush.msra.mxu0 0.0
  %1189 = vmatpush.msra.mxu0 0.0
  %1190 = vmatpush.msra.mxu0 0.0
  %1191 = vmatpush.msra.mxu0 0.0
  %1192 = vmatpush.msra.mxu0 %v106
  %1193 = vmatpush.msra.mxu0 %v105
  %1194 = vmatpush.msra.mxu0 %v104
  %1195 = vmatpush.msra.mxu0 %v103
  %1196 = vmatmul.f32.gmra.mxu0 %v1178
  %v1197 = vpop.f32.mrf.mxu0
  %v1198 = vadd.f32 0.0, %v1197
  %1199 = vdwg.mxu0
  %v1200 = vadd.f32 %v94, %v1198
  %v1201 = vxor.u32 %v1174, 2147483648
  %v1202 = vmul.f32 %v1201, 1.442695
  %v1203 = vpow.pop %v1202
  %v1204 = vadd.f32 %v1203, 1.0
  %v1205 = vrcp.pop %v1204
  %v1206 = vmul.f32 %v1204, %v1205
  %v1207 = vsub.f32 1.0, %v1206
  %v1208 = vmul.f32 %v1205, %v1207
  %v1209 = vadd.f32 %v1205, %v1208
  %vm1210 = vweird.f32 %v1204
  %vm1211 = vweird.f32 %v1205
  %vm1212 = vmor %vm1210, %vm1211
  %v1213 = vsel %vm1212, %v1205, %v1209
  %v1214 = vand.u32 2147483647, %v1204
  %vm1215 = vcmp.eq.f32.partialorder %v1214, 8.507059e+37
  %v1216 = vand.u32 %v1204, 2147483648
  %v1217 = vor.u32 1.1754944e-38, %v1216
  %v1218 = vsel %vm1215, %v1217, %v1213
  %v1219 = vmul.f32 1.0, %v1218
  %v1220 = vtanh.pop %v1174
  %v1222 = vrot.slane %v1083, 6
  %v1224 = vmul.f32 %v1219, %v1222
  %1226 = vrot.lane.b32.xlu0 %v1220, 32
  %v1227 = vpop.permute.xlu0 %1226
  %v1229 = vmul.f32 %v1219, %v1227
  %1231 = vrot.lane.b32.xlu0 %v1229, 32
  %v1232 = vpop.permute.xlu0 %1231
  %v1234 = vadd.f32 %v1224, %v1232
  %v1235 = vtanh.pop %v1234
  %1237 = vrot.lane.b32.xlu0 %v1235, 32
  %v1238 = vpop.permute.xlu0 %1237
  %v1240 = vmul.f32 %v1219, %v1238
  %v1241 = vxor.u32 %v1200, 2147483648
  %v1242 = vmul.f32 %v1241, 1.442695
  %v1243 = vpow.pop %v1242
  %v1244 = vadd.f32 %v1243, 1.0
  %v1245 = vrcp.pop %v1244
  %v1246 = vmul.f32 %v1244, %v1245
  %v1247 = vsub.f32 1.0, %v1246
  %v1248 = vmul.f32 %v1245, %v1247
  %v1249 = vadd.f32 %v1245, %v1248
  %vm1250 = vweird.f32 %v1244
  %vm1251 = vweird.f32 %v1245
  %vm1252 = vmor %vm1250, %vm1251
  %v1253 = vsel %vm1252, %v1245, %v1249
  %v1254 = vand.u32 2147483647, %v1244
  %vm1255 = vcmp.eq.f32.partialorder %v1254, 8.507059e+37
  %v1256 = vand.u32 %v1244, 2147483648
  %v1257 = vor.u32 1.1754944e-38, %v1256
  %v1258 = vsel %vm1255, %v1257, %v1253
  %v1259 = vmul.f32 1.0, %v1258
  %v1260 = vtanh.pop %v1200
  %v1262 = vrot.slane %v1123, 2
  %v1264 = vmul.f32 %v1259, %v1262
  %1266 = vrot.lane.b32.xlu0 %v1260, 32
  %v1267 = vpop.permute.xlu0 %1266
  %v1269 = vmul.f32 %v1259, %v1267
  %1271 = vrot.lane.b32.xlu0 %v1269, 32
  %v1272 = vpop.permute.xlu0 %1271
  %v1274 = vadd.f32 %v1264, %v1272
  %v1275 = vtanh.pop %v1274
  %1277 = vrot.lane.b32.xlu0 %v1275, 32
  %v1278 = vpop.permute.xlu0 %1277
  %v1280 = vmul.f32 %v1259, %v1278
  %1282 = vst.sshfl [vmem:[#allocation1] sm:$0xff pattern:$0x73625140] %v1240
  %s1283 = scalar_lea.vmem [#allocation1], 3
  %v1284 = vld [vmem:[%s1283] ss:$4 sm:$0xff]
  %1286 = vst.msk [vmem:[#allocation2 + $0x6] sm:$0x3] %vm385, %v1284
  %1288 = vrot.lane.b32.xlu0 %v1280, 96
  %v1289 = vpop.permute.xlu0 %1288
  %1291 = vst.msk [vmem:[#allocation2] sm:$0x3] %vm394, %v1289
  %v1292 = vld [vmem:[#allocation2] sm:$0xff]
  %v1293 = vld [vmem:[%s5] sm:$0xff]
  %v1294 = vld [vmem:[%s5 + $0x8] sm:$0xff]
  %v1295 = vld [vmem:[%s5 + $0x10] sm:$0xff]
  %v1296 = vld [vmem:[%s5 + $0x18] sm:$0xff]
  %v1297 = vld [vmem:[%s5 + $0x20] sm:$0xff]
  %v1298 = vld [vmem:[%s5 + $0x28] sm:$0xff]
  %v1299 = vld [vmem:[%s5 + $0x30] sm:$0xff]
  %v1300 = vld [vmem:[%s5 + $0x38] sm:$0xff]
  %v1301 = vld [vmem:[%s5 + $0x40] sm:$0xff]
  %v1302 = vld [vmem:[%s5 + $0x48] sm:$0xff]
  %v1303 = vld [vmem:[%s5 + $0x50] sm:$0xff]
  %v1304 = vld [vmem:[%s5 + $0x58] sm:$0xff]
  %v1305 = vld [vmem:[%s5 + $0x60] sm:$0xff]
  %v1306 = vld [vmem:[%s5 + $0x68] sm:$0xff]
  %v1307 = vld [vmem:[%s5 + $0x70] sm:$0xff]
  %v1308 = vld [vmem:[%s5 + $0x78] sm:$0xff]
  %v1309 = vld [vmem:[%s5 + $0x80] sm:$0xff]
  %v1310 = vld [vmem:[%s5 + $0x88] sm:$0xff]
  %v1311 = vld [vmem:[%s5 + $0x90] sm:$0xff]
  %v1312 = vld [vmem:[%s5 + $0x98] sm:$0xff]
  %v1313 = vld [vmem:[%s5 + $0xa0] sm:$0xff]
  %v1314 = vld [vmem:[%s5 + $0xa8] sm:$0xff]
  %v1315 = vld [vmem:[%s5 + $0xb0] sm:$0xff]
  %v1316 = vld [vmem:[%s5 + $0xb8] sm:$0xff]
  %v1317 = vld [vmem:[%s5 + $0xc0] sm:$0xff]
  %v1318 = vld [vmem:[%s5 + $0xc8] sm:$0xff]
  %v1319 = vld [vmem:[%s5 + $0xd0] sm:$0xff]
  %v1320 = vld [vmem:[%s5 + $0xd8] sm:$0xff]
  %v1321 = vld [vmem:[%s5 + $0xe0] sm:$0xff]
  %v1322 = vld [vmem:[%s5 + $0xe8] sm:$0xff]
  %v1323 = vld [vmem:[%s5 + $0xf0] sm:$0xff]
  %v1324 = vld [vmem:[%s5 + $0xf8] sm:$0xff]
  %v1325 = vld [vmem:[%s5 + $0x100] sm:$0xff]
  %v1326 = vld [vmem:[%s5 + $0x108] sm:$0xff]
  %v1327 = vld [vmem:[%s5 + $0x110] sm:$0xff]
  %v1328 = vld [vmem:[%s5 + $0x118] sm:$0xff]
  %v1329 = vld [vmem:[%s5 + $0x120] sm:$0xff]
  %v1330 = vld [vmem:[%s5 + $0x128] sm:$0xff]
  %v1331 = vld [vmem:[%s5 + $0x130] sm:$0xff]
  %v1332 = vld [vmem:[%s5 + $0x138] sm:$0xff]
  %v1333 = vld [vmem:[%s5 + $0x140] sm:$0xff]
  %v1334 = vld [vmem:[%s5 + $0x148] sm:$0xff]
  %v1335 = vld [vmem:[%s5 + $0x150] sm:$0xff]
  %v1336 = vld [vmem:[%s5 + $0x158] sm:$0xff]
  %v1337 = vld [vmem:[%s5 + $0x160] sm:$0xff]
  %v1338 = vld [vmem:[%s5 + $0x168] sm:$0xff]
  %v1339 = vld [vmem:[%s5 + $0x170] sm:$0xff]
  %v1340 = vld [vmem:[%s5 + $0x178] sm:$0xff]
  %v1341 = vld [vmem:[%s5 + $0x180] sm:$0xff]
  %v1342 = vld [vmem:[%s5 + $0x188] sm:$0xff]
  %v1343 = vld [vmem:[%s5 + $0x190] sm:$0xff]
  %v1344 = vld [vmem:[%s5 + $0x198] sm:$0xff]
  %v1345 = vld [vmem:[%s5 + $0x1a0] sm:$0xff]
  %v1346 = vld [vmem:[%s5 + $0x1a8] sm:$0xff]
  %v1347 = vld [vmem:[%s5 + $0x1b0] sm:$0xff]
  %v1348 = vld [vmem:[%s5 + $0x1b8] sm:$0xff]
  %v1349 = vld [vmem:[%s5 + $0x1c0] sm:$0xff]
  %v1350 = vld [vmem:[%s5 + $0x1c8] sm:$0xff]
  %v1351 = vld [vmem:[%s5 + $0x1d0] sm:$0xff]
  %v1352 = vld [vmem:[%s5 + $0x1d8] sm:$0xff]
  %v1353 = vld [vmem:[%s5 + $0x1e0] sm:$0xff]
  %v1354 = vld [vmem:[%s5 + $0x1e8] sm:$0xff]
  %v1355 = vld [vmem:[%s5 + $0x1f0] sm:$0xff]
  %v1356 = vld [vmem:[%s5 + $0x1f8] sm:$0xff]
  %v1357 = vld [vmem:[%s6] sm:$0x1]
  %v1359 = vperm.slane %v1357, 0
  %1362 = vst [vmem:[#allocation1] ss:$4 sm:$0xff] %v1292
  %v1363 = vld.sshfl [vmem:[#allocation1] sm:$0xff pattern:$0x73625140]
  %v1364 = vld.sshfl [vmem:[#allocation1 + $0x8] sm:$0xff pattern:$0x73625140]
  %v1365 = vld.sshfl [vmem:[#allocation1 + $0x10] sm:$0xff pattern:$0x73625140]
  %v1366 = vld.sshfl [vmem:[#allocation1 + $0x18] sm:$0xff pattern:$0x73625140]
  %1371 = vmatpush.msra.mxu0 %v1308
  %1372 = vmatpush.msra.mxu0 %v1307
  %1373 = vmatpush.msra.mxu0 %v1306
  %1374 = vmatpush.msra.mxu0 %v1305
  %1375 = vmatpush.msra.mxu0 %v1304
  %1376 = vmatpush.msra.mxu0 %v1303
  %1377 = vmatpush.msra.mxu0 %v1302
  %1378 = vmatpush.msra.mxu0 %v1301
  %1379 = vmatpush.msra.mxu0 %v1300
  %1380 = vmatpush.msra.mxu0 %v1299
  %1381 = vmatpush.msra.mxu0 %v1298
  %1382 = vmatpush.msra.mxu0 %v1297
  %1383 = vmatpush.msra.mxu0 %v1296
  %1384 = vmatpush.msra.mxu0 %v1295
  %1385 = vmatpush.msra.mxu0 %v1294
  %1386 = vmatpush.msra.mxu0 %v1293
  %1387 = vmatmul.f32.gmra.mxu0 %v1363
  %v1388 = vpop.f32.mrf.mxu0
  %v1389 = vadd.f32 %v1359, %v1388
  %1390 = vdwg.mxu0
  %1391 = vmatpush.msra.mxu0 %v1324
  %1392 = vmatpush.msra.mxu0 %v1323
  %1393 = vmatpush.msra.mxu0 %v1322
  %1394 = vmatpush.msra.mxu0 %v1321
  %1395 = vmatpush.msra.mxu0 %v1320
  %1396 = vmatpush.msra.mxu0 %v1319
  %1397 = vmatpush.msra.mxu0 %v1318
  %1398 = vmatpush.msra.mxu0 %v1317
  %1399 = vmatpush.msra.mxu0 %v1316
  %1400 = vmatpush.msra.mxu0 %v1315
  %1401 = vmatpush.msra.mxu0 %v1314
  %1402 = vmatpush.msra.mxu0 %v1313
  %1403 = vmatpush.msra.mxu0 %v1312
  %1404 = vmatpush.msra.mxu0 %v1311
  %1405 = vmatpush.msra.mxu0 %v1310
  %1406 = vmatpush.msra.mxu0 %v1309
  %1407 = vmatmul.f32.gmra.mxu0 %v1364
  %v1408 = vpop.f32.mrf.mxu0
  %v1409 = vadd.f32 %v1389, %v1408
  %1410 = vdwg.mxu0
  %1411 = vmatpush.msra.mxu0 %v1340
  %1412 = vmatpush.msra.mxu0 %v1339
  %1413 = vmatpush.msra.mxu0 %v1338
  %1414 = vmatpush.msra.mxu0 %v1337
  %1415 = vmatpush.msra.mxu0 %v1336
  %1416 = vmatpush.msra.mxu0 %v1335
  %1417 = vmatpush.msra.mxu0 %v1334
  %1418 = vmatpush.msra.mxu0 %v1333
  %1419 = vmatpush.msra.mxu0 %v1332
  %1420 = vmatpush.msra.mxu0 %v1331
  %1421 = vmatpush.msra.mxu0 %v1330
  %1422 = vmatpush.msra.mxu0 %v1329
  %1423 = vmatpush.msra.mxu0 %v1328
  %1424 = vmatpush.msra.mxu0 %v1327
  %1425 = vmatpush.msra.mxu0 %v1326
  %1426 = vmatpush.msra.mxu0 %v1325
  %1427 = vmatmul.f32.gmra.mxu0 %v1365
  %v1428 = vpop.f32.mrf.mxu0
  %v1429 = vadd.f32 %v1409, %v1428
  %1430 = vdwg.mxu0
  %1431 = vmatpush.msra.mxu0 %v1356
  %1432 = vmatpush.msra.mxu0 %v1355
  %1433 = vmatpush.msra.mxu0 %v1354
  %1434 = vmatpush.msra.mxu0 %v1353
  %1435 = vmatpush.msra.mxu0 %v1352
  %1436 = vmatpush.msra.mxu0 %v1351
  %1437 = vmatpush.msra.mxu0 %v1350
  %1438 = vmatpush.msra.mxu0 %v1349
  %1439 = vmatpush.msra.mxu0 %v1348
  %1440 = vmatpush.msra.mxu0 %v1347
  %1441 = vmatpush.msra.mxu0 %v1346
  %1442 = vmatpush.msra.mxu0 %v1345
  %1443 = vmatpush.msra.mxu0 %v1344
  %1444 = vmatpush.msra.mxu0 %v1343
  %1445 = vmatpush.msra.mxu0 %v1342
  %1446 = vmatpush.msra.mxu0 %v1341
  %1447 = vmatmul.f32.gmra.mxu0 %v1366
  %v1448 = vpop.f32.mrf.mxu0
  %v1449 = vadd.f32 %v1429, %v1448
  %1450 = vdwg.mxu0
  %v1451 = vmax.f32 %v1449, 0.0
  %v1452 = vld [vmem:[%s7] sm:$0xff]
  %v1453 = vld [vmem:[%s7 + $0x8] sm:$0xff]
  %v1454 = vld [vmem:[%s7 + $0x10] sm:$0xff]
  %v1455 = vld [vmem:[%s7 + $0x18] sm:$0xff]
  %v1456 = vld [vmem:[#allocation3] sm:$0x1]
  %v1458 = vperm.slane %v1456, 0
  %v1461 = vsel %vm107, %v1451, 0
  %1463 = vmatpush.msra.mxu0 0.0
  %1464 = vmatpush.msra.mxu0 0.0
  %1465 = vmatpush.msra.mxu0 0.0
  %1466 = vmatpush.msra.mxu0 0.0
  %1467 = vmatpush.msra.mxu0 0.0
  %1468 = vmatpush.msra.mxu0 0.0
  %1469 = vmatpush.msra.mxu0 0.0
  %1470 = vmatpush.msra.mxu0 0.0
  %1471 = vmatpush.msra.mxu0 0.0
  %1472 = vmatpush.msra.mxu0 0.0
  %1473 = vmatpush.msra.mxu0 0.0
  %1474 = vmatpush.msra.mxu0 0.0
  %1475 = vmatpush.msra.mxu0 %v1455
  %1476 = vmatpush.msra.mxu0 %v1454
  %1477 = vmatpush.msra.mxu0 %v1453
  %1478 = vmatpush.msra.mxu0 %v1452
  %1479 = vmatmul.f32.gmra.mxu0 %v1461
  %v1480 = vpop.f32.mrf.mxu0
  %v1481 = vadd.f32 %v1458, %v1480
  %1482 = vdwg.mxu0
  %vm1483 = vcmask 1024
  %1484 = vst.msk [vmem:[%s9] sm:$0x3] %vm1483, %v1481
  // Predicated region
  $region38: #{lstm_base_forward.1} parent=0 // pred_check
    _
  $region39: #{lstm_base_forward.1} parent=0 // pred_check_branch
    %1486 = sbr.rel (0) target = $region41
  $region40: #{lstm_base_forward.1} parent=0 // pred_region
    _
  $region41: #{lstm_base_forward.1} parent=0 // pred_fallthru
    _
  // Predicated region
  $region42: #{lstm_base_forward.1} parent=0 // pred_check
    _
  $region43: #{lstm_base_forward.1} parent=0 // pred_check_branch
    %1488 = sbr.rel (0) target = $region45
  $region44: #{lstm_base_forward.1} parent=0 // pred_region
    _
  $region45: #{lstm_base_forward.1} parent=0 // pred_fallthru
    _

</llo_original>
